<compile_context>
chip_gen: v7x
topology: tpu7x:2x2x1
jax: 0.10.0
libtpu: 0.0.40
codegen_flags: <defaults>
</compile_context>

<pallas_src>
import jax
import jax.numpy as jnp
from jax import lax
from jax.experimental import pallas as pl
from jax.experimental.pallas import tpu as pltpu


def _sentclf_kernel(emb_ref, mask_ref, inv_ref, w_ref, b_ref,
                    logits_ref, probs_ref, pred_ref,
                    sum_ref):
    s = pl.program_id(1)

    # --- init accumulator at the first sequence tile ---
    @pl.when(s == 0)
    def _():
        sum_ref[...] = jnp.zeros_like(sum_ref)

    # --- streaming masked accumulation (Pooling(mode='mean') numerator) ---
    # emb may be bf16; multiplying by the f32 mask promotes to f32 and the
    # result accumulates into the f32 VMEM scratch.
    emb = emb_ref[...]                              # [TB, TS, H]
    mask = mask_ref[...]                            # [TB, TS] f32 (0/1)
    sum_ref[...] += jnp.sum(emb * mask[:, :, None], axis=1)     # [TB, H]

    # --- epilogue only on the final sequence tile ---
    @pl.when(s == pl.num_programs(1) - 1)
    def _():
        # mean pooling: sum_embeddings * (1 / clamp_min(num_tokens, 1e-8))
        pooled = sum_ref[...] * inv_ref[...]                          # [TB, H]

        # linear classifier: logits = pooled @ W + b
        logits = jnp.dot(pooled, w_ref[...],
                         preferred_element_type=jnp.float32) + b_ref[...]  # [TB, O]
        logits_ref[...] = logits

        # softmax over last dim
        m = jnp.max(logits, axis=-1, keepdims=True)
        e = jnp.exp(logits - m)
        probs_ref[...] = e / jnp.sum(e, axis=-1, keepdims=True)

        # argmax over last dim (first occurrence of the max, like torch)
        tb, o = logits.shape
        idx = lax.broadcasted_iota(jnp.int32, (tb, o), 1)
        cand = jnp.where(logits == m, idx, jnp.full((tb, o), o, dtype=jnp.int32))
        pred_ref[...] = jnp.min(cand, axis=-1, keepdims=True)         # [TB, 1]


def _vmem_limit_bytes():
    """Scoped-VMEM limit derived from the real chip: ~75% of physical VMEM,
    capped at 96 MiB (v5e/v6e: 128 MiB physical -> 96; v7x: 64 MiB -> 48)."""
    try:
        vmem = int(pltpu.get_tpu_info().vmem_capacity_bytes)
    except Exception:
        vmem = 64 << 20          # conservative fallback (v7x per-TC VMEM)
    return max(32 << 20, min((vmem * 3) // 4, 96 << 20))


def _choose_tiles(B, S, H, emb_itemsize, budget_bytes):
    """Pick (TB, TS) so blocks respect the (8,128)/(16,128) rules, the batch
    axis has >= 2 tiles (megacore / dual-TC sharding) and the sequence axis has
    >= 2 tiles (keeps the double-buffered pipeline busy) whenever possible,
    while the streamed tiles + f32 intermediates stay under the VMEM budget."""
    # Batch tile: multiple of 8, preferring nb >= 2; else full B.
    mult8 = [c for c in (64, 32, 16, 8) if B % c == 0]
    pref = [c for c in mult8 if B // c >= 2]
    if pref:
        tb = pref[0]
    elif mult8:
        tb = mult8[0]
    else:
        tb = B

    def fits(ts):
        emb_b = tb * ts * H * emb_itemsize       # streamed embedding tile
        mask_b = tb * ts * 4                     # streamed lane-dense mask tile
        interm = 2 * tb * ts * H * 4             # f32 elementwise intermediates
        return 2 * (emb_b + mask_b) + interm <= budget_bytes

    # Sequence tile: divisor of S, multiple of 16 (bf16 sublane packing).
    divisors = sorted((d for d in range(16, S + 1, 16) if S % d == 0),
                      reverse=True)
    ts = None
    for d in divisors:                           # prefer ns >= 2
        if S // d >= 2 and fits(d):
            ts = d
            break
    if ts is None:
        for d in divisors:                       # fall back: allow ns == 1
            if fits(d):
                ts = d
                break
    if ts is None:
        ts = divisors[-1] if divisors else S     # smallest legal tile / full S
    return tb, ts


def sentence_classifier_forward(token_embeddings, attention_mask, w, b):
    """token_embeddings: [B,S,H] (bf16 or f32); attention_mask: [B,S];
    w: [H,O]; b: [O]."""
    B, S, H = token_embeddings.shape
    O = w.shape[1]

    vmem_limit = _vmem_limit_bytes()
    TB, TS = _choose_tiles(B, S, H, token_embeddings.dtype.itemsize,
                           budget_bytes=int(vmem_limit * 0.65))
    nb, ns = B // TB, S // TS

    # Lane-dense 2-D mask; tiny host-side 1/num_tokens (clamped) vector.
    mask2 = attention_mask.astype(jnp.float32)                            # [B, S]
    inv_cnt = 1.0 / jnp.maximum(mask2.sum(axis=1, keepdims=True), 1e-8)   # [B, 1]
    w2 = w.astype(jnp.float32)
    b2 = b.reshape(1, O).astype(jnp.float32)

    logits, probs, pred = pl.pallas_call(
        _sentclf_kernel,
        grid=(nb, ns),
        in_specs=[
            pl.BlockSpec((TB, TS, H), lambda i, s: (i, s, 0)),   # emb, streamed
            pl.BlockSpec((TB, TS), lambda i, s: (i, s)),         # mask, lane-dense
            pl.BlockSpec((TB, 1), lambda i, s: (i, 0)),          # 1/num_tokens
            pl.BlockSpec((H, O), lambda i, s: (0, 0)),           # W resident
            pl.BlockSpec((1, O), lambda i, s: (0, 0)),           # b resident
        ],
        out_specs=[
            pl.BlockSpec((TB, O), lambda i, s: (i, 0)),
            pl.BlockSpec((TB, O), lambda i, s: (i, 0)),
            pl.BlockSpec((TB, 1), lambda i, s: (i, 0)),
        ],
        out_shape=[
            jax.ShapeDtypeStruct((B, O), jnp.float32),
            jax.ShapeDtypeStruct((B, O), jnp.float32),
            jax.ShapeDtypeStruct((B, 1), jnp.int32),
        ],
        scratch_shapes=[
            pltpu.VMEM((TB, H), jnp.float32),   # running masked sum
        ],
        compiler_params=pltpu.CompilerParams(
            dimension_semantics=("parallel", "arbitrary"),
            vmem_limit_bytes=vmem_limit,
        ),
    )(token_embeddings, mask2, inv_cnt, w2, b2)

    return {
        "logit": logits,
        "probability": probs,
        "prediction": pred.reshape(B),
    }


if __name__ == "__main__":
    key = jax.random.PRNGKey(0)
    k_emb, k_w, k_b = jax.random.split(key, 3)

    # batch=16, seq=512, hidden=128, output_dim=8.  With the tile heuristic this
    # gives TB=8, TS=256 -> grid=(2,2): exercises the parallel batch axis, the
    # s==0 init path and the multi-tile streamed accumulation.
    B, S, H, O = 16, 512, 128, 8

    # bf16 encoder output (halves HBM traffic of the bandwidth-bound kernel).
    token_embeddings = jax.random.normal(
        k_emb, (B, S, H), dtype=jnp.float32).astype(jnp.bfloat16)

    # Deterministic variable-length attention mask (1 = real token, 0 = pad).
    lengths = (jnp.arange(B, dtype=jnp.int32) * 29) % S + 16
    attention_mask = (jnp.arange(S, dtype=jnp.int32)[None, :]
                      < lengths[:, None]).astype(jnp.float32)

    # nn.Linear(H, O) parameters, deterministic init (W passed as [H, O]).
    w = jax.random.normal(k_w, (H, O), dtype=jnp.float32) * 0.05
    b = jax.random.normal(k_b, (O,), dtype=jnp.float32) * 0.05

    out = sentence_classifier_forward(token_embeddings, attention_mask, w, b)
    jax.block_until_ready(out)

    # Plain-JAX reference (matches the torch module's mean pooling + Linear head).
    emb_f32 = token_embeddings.astype(jnp.float32)
    num_tok = jnp.maximum(attention_mask.sum(1, keepdims=True), 1e-8)
    pooled_ref = (emb_f32 * attention_mask[:, :, None]).sum(1) / num_tok
    logits_ref = pooled_ref @ w + b
    assert jnp.allclose(out["logit"], logits_ref, atol=2e-3, rtol=1e-3)
    assert jnp.allclose(out["probability"], jax.nn.softmax(logits_ref, -1), atol=1e-3)
    assert jnp.array_equal(out["prediction"], jnp.argmax(logits_ref, -1))

    print("KERNEL_OK")
</pallas_src>

<mosaic_0001>
module attributes {stable_mosaic.version = 11 : i64} {
  func.func @_sentclf_kernel(%arg0: i32, %arg1: i32, %arg2: memref<8x256x128xbf16, #tpu.memory_space<vmem>>, %arg3: memref<8x256xf32, #tpu.memory_space<vmem>>, %arg4: memref<8x1xf32, #tpu.memory_space<vmem>>, %arg5: memref<128x8xf32, #tpu.memory_space<vmem>>, %arg6: memref<1x8xf32, #tpu.memory_space<vmem>>, %arg7: memref<8x8xf32, #tpu.memory_space<vmem>>, %arg8: memref<8x8xf32, #tpu.memory_space<vmem>>, %arg9: memref<8x1xi32, #tpu.memory_space<vmem>>, %arg10: memref<8x128xf32, #tpu.memory_space<vmem>>) attributes {dimension_semantics = [#tpu.dimension_semantics<parallel>, #tpu.dimension_semantics<arbitrary>], iteration_bounds = array<i64: 2, 2>, scalar_prefetch = 0 : i64, scratch_operands = 1 : i64, tpu.core_type = #tpu.core_type<tc>, window_params = [{transform_indices = @transform_0, window_bounds = array<i64: 8, 256, 128>}, {transform_indices = @transform_1, window_bounds = array<i64: 8, 256>}, {transform_indices = @transform_2, window_bounds = array<i64: 8, 1>}, {pipeline_mode = #tpu.pipeline_mode<synchronous>, transform_indices = @transform_3, window_bounds = array<i64: 128, 8>}, {pipeline_mode = #tpu.pipeline_mode<synchronous>, transform_indices = @transform_4, window_bounds = array<i64: 1, 8>}, {transform_indices = @transform_5, window_bounds = array<i64: 8, 8>}, {transform_indices = @transform_6, window_bounds = array<i64: 8, 8>}, {transform_indices = @transform_7, window_bounds = array<i64: 8, 1>}]} {
    %c0_i32 = arith.constant 0 : i32
    %0 = arith.cmpi eq, %arg1, %c0_i32 : i32
    %1 = arith.extui %0 : i1 to i32
    %c0_i32_0 = arith.constant 0 : i32
    %2 = arith.cmpi ne, %1, %c0_i32_0 : i32
    scf.if %2 {
      %cst_10 = arith.constant 0.000000e+00 : f32
      %16 = vector.broadcast %cst_10 : f32 to vector<8x128xf32>
      %c0_11 = arith.constant 0 : index
      %c0_12 = arith.constant 0 : index
      %17 = vector.load %arg10[%c0_11, %c0_12] : memref<8x128xf32, #tpu.memory_space<vmem>>, vector<8x128xf32>
      tpu.vector_store %arg10[%c0_11, %c0_12], %16 {strides = array<i32>} : memref<8x128xf32, #tpu.memory_space<vmem>>, vector<8x128xf32>,
    } else {
    }
    %c0 = arith.constant 0 : index
    %c0_1 = arith.constant 0 : index
    %c0_2 = arith.constant 0 : index
    %3 = vector.load %arg2[%c0, %c0_1, %c0_2] : memref<8x256x128xbf16, #tpu.memory_space<vmem>>, vector<8x256x128xbf16>
    %c0_3 = arith.constant 0 : index
    %c0_4 = arith.constant 0 : index
    %4 = vector.load %arg3[%c0_3, %c0_4] : memref<8x256xf32, #tpu.memory_space<vmem>>, vector<8x256xf32>
    %c0_5 = arith.constant 0 : index
    %c0_6 = arith.constant 0 : index
    %5 = vector.load %arg10[%c0_5, %c0_6] : memref<8x128xf32, #tpu.memory_space<vmem>>, vector<8x128xf32>
    %6 = vector.shape_cast %4 : vector<8x256xf32> to vector<8x256x1xf32>
    %7 = arith.extf %3 : vector<8x256x128xbf16> to vector<8x256x128xf32>
    %8 = vector.broadcast %6 : vector<8x256x1xf32> to vector<8x256x128xf32>
    %9 = arith.mulf %7, %8 : vector<8x256x128xf32>
    %cst = arith.constant dense<0.000000e+00> : vector<8x128xf32>
    %10 = vector.multi_reduction <add>, %9, %cst [1] : vector<8x256x128xf32> to vector<8x128xf32>
    %11 = arith.addf %5, %10 : vector<8x128xf32>
    %c0_7 = arith.constant 0 : index
    %c0_8 = arith.constant 0 : index
    %12 = vector.load %arg10[%c0_7, %c0_8] : memref<8x128xf32, #tpu.memory_space<vmem>>, vector<8x128xf32>
    tpu.vector_store %arg10[%c0_7, %c0_8], %11 {strides = array<i32>} : memref<8x128xf32, #tpu.memory_space<vmem>>, vector<8x128xf32>,
    %c1_i32 = arith.constant 1 : i32
    %13 = arith.cmpi eq, %arg1, %c1_i32 : i32
    %14 = arith.extui %13 : i1 to i32
    %c0_i32_9 = arith.constant 0 : i32
    %15 = arith.cmpi ne, %14, %c0_i32_9 : i32
    scf.if %15 {
      %c0_10 = arith.constant 0 : index
      %c0_11 = arith.constant 0 : index
      %16 = vector.load %arg10[%c0_10, %c0_11] : memref<8x128xf32, #tpu.memory_space<vmem>>, vector<8x128xf32>
      %c0_12 = arith.constant 0 : index
      %c0_13 = arith.constant 0 : index
      %17 = vector.load %arg4[%c0_12, %c0_13] : memref<8x1xf32, #tpu.memory_space<vmem>>, vector<8x1xf32>
      %18 = vector.broadcast %17 : vector<8x1xf32> to vector<8x128xf32>
      %19 = arith.mulf %16, %18 : vector<8x128xf32>
      %c0_14 = arith.constant 0 : index
      %c0_15 = arith.constant 0 : index
      %20 = vector.load %arg5[%c0_14, %c0_15] : memref<128x8xf32, #tpu.memory_space<vmem>>, vector<128x8xf32>
      %cst_16 = arith.constant dense<0.000000e+00> : vector<8x8xf32>
      %21 = tpu.matmul %19, %20, %cst_16 {dimension_numbers = #tpu.dot_dimension_numbers<[1], [0], [0], [1], [0, 0, 1, 1], [], []>} : vector<8x128xf32>, vector<128x8xf32>, vector<8x8xf32> -> vector<8x8xf32>
      %c0_17 = arith.constant 0 : index
      %c0_18 = arith.constant 0 : index
      %22 = vector.load %arg6[%c0_17, %c0_18] : memref<1x8xf32, #tpu.memory_space<vmem>>, vector<1x8xf32>
      %23 = vector.broadcast %22 : vector<1x8xf32> to vector<8x8xf32>
      %24 = arith.addf %21, %23 : vector<8x8xf32>
      %c0_19 = arith.constant 0 : index
      %c0_20 = arith.constant 0 : index
      %25 = vector.load %arg7[%c0_19, %c0_20] : memref<8x8xf32, #tpu.memory_space<vmem>>, vector<8x8xf32>
      tpu.vector_store %arg7[%c0_19, %c0_20], %24 {strides = array<i32>} : memref<8x8xf32, #tpu.memory_space<vmem>>, vector<8x8xf32>,
      %cst_21 = arith.constant dense<0xFF800000> : vector<8xf32>
      %26 = vector.multi_reduction <maximumf>, %24, %cst_21 [1] : vector<8x8xf32> to vector<8xf32>
      %27 = vector.shape_cast %26 : vector<8xf32> to vector<8x1xf32>
      %28 = vector.broadcast %27 : vector<8x1xf32> to vector<8x8xf32>
      %29 = arith.subf %24, %28 : vector<8x8xf32>
      %30 = math.exp %29 : vector<8x8xf32>
      %cst_22 = arith.constant dense<0.000000e+00> : vector<8xf32>
      %31 = vector.multi_reduction <add>, %30, %cst_22 [1] : vector<8x8xf32> to vector<8xf32>
      %32 = vector.shape_cast %31 : vector<8xf32> to vector<8x1xf32>
      %33 = vector.broadcast %32 : vector<8x1xf32> to vector<8x8xf32>
      %34 = arith.divf %30, %33 : vector<8x8xf32>
      %c0_23 = arith.constant 0 : index
      %c0_24 = arith.constant 0 : index
      %35 = vector.load %arg8[%c0_23, %c0_24] : memref<8x8xf32, #tpu.memory_space<vmem>>, vector<8x8xf32>
      tpu.vector_store %arg8[%c0_23, %c0_24], %34 {strides = array<i32>} : memref<8x8xf32, #tpu.memory_space<vmem>>, vector<8x8xf32>,
      %36 = tpu.iota {dimensions = array<i32: 1>} : vector<8x8xi32>
      %37 = vector.broadcast %27 : vector<8x1xf32> to vector<8x8xf32>
      %38 = arith.cmpf oeq, %24, %37 : vector<8x8xf32>
      %c8_i32 = arith.constant 8 : i32
      %39 = vector.broadcast %c8_i32 : i32 to vector<8x8xi32>
      %40 = arith.select %38, %36, %39 : vector<8x8xi1>, vector<8x8xi32>
      %cst_25 = arith.constant dense<2147483647> : vector<8xi32>
      %41 = vector.multi_reduction <minsi>, %40, %cst_25 [1] : vector<8x8xi32> to vector<8xi32>
      %42 = vector.shape_cast %41 : vector<8xi32> to vector<8x1xi32>
      %c0_26 = arith.constant 0 : index
      %c0_27 = arith.constant 0 : index
      %43 = vector.load %arg9[%c0_26, %c0_27] : memref<8x1xi32, #tpu.memory_space<vmem>>, vector<8x1xi32>
      tpu.vector_store %arg9[%c0_26, %c0_27], %42 {strides = array<i32>} : memref<8x1xi32, #tpu.memory_space<vmem>>, vector<8x1xi32>,
    } else {
    }
    return
  }
  func.func @transform_0(%arg0: i32, %arg1: i32) -> (i32, i32, i32) {
    %c0_i32 = arith.constant 0 : i32
    %c0_i32_0 = arith.constant 0 : i32
    return %arg0, %arg1, %c0_i32 : i32, i32, i32
  }
  func.func @transform_1(%arg0: i32, %arg1: i32) -> (i32, i32) {
    %c0_i32 = arith.constant 0 : i32
    return %arg0, %arg1 : i32, i32
  }
  func.func @transform_2(%arg0: i32, %arg1: i32) -> (i32, i32) {
    %c0_i32 = arith.constant 0 : i32
    %c0_i32_0 = arith.constant 0 : i32
    return %arg0, %c0_i32 : i32, i32
  }
  func.func @transform_3(%arg0: i32, %arg1: i32) -> (i32, i32) {
    %c0_i32 = arith.constant 0 : i32
    %c0_i32_0 = arith.constant 0 : i32
    %c0_i32_1 = arith.constant 0 : i32
    return %c0_i32, %c0_i32_0 : i32, i32
  }
  func.func @transform_4(%arg0: i32, %arg1: i32) -> (i32, i32) {
    %c0_i32 = arith.constant 0 : i32
    %c0_i32_0 = arith.constant 0 : i32
    %c0_i32_1 = arith.constant 0 : i32
    return %c0_i32, %c0_i32_0 : i32, i32
  }
  func.func @transform_5(%arg0: i32, %arg1: i32) -> (i32, i32) {
    %c0_i32 = arith.constant 0 : i32
    %c0_i32_0 = arith.constant 0 : i32
    return %arg0, %c0_i32 : i32, i32
  }
  func.func @transform_6(%arg0: i32, %arg1: i32) -> (i32, i32) {
    %c0_i32 = arith.constant 0 : i32
    %c0_i32_0 = arith.constant 0 : i32
    return %arg0, %c0_i32 : i32, i32
  }
  func.func @transform_7(%arg0: i32, %arg1: i32) -> (i32, i32) {
    %c0_i32 = arith.constant 0 : i32
    %c0_i32_0 = arith.constant 0 : i32
    return %arg0, %c0_i32 : i32, i32
  }
}

</mosaic_0001>

<llo_original>
// kernel: tpu_custom_call.1
$region0: #{tpu_custom_call.1}
  #allocation0 [shape = 'u32[]', space=smem, size = 0x4, offset = 0x4, fixed_abs, tag = 'smem constant byte address 0x4 - core index']
  #allocation1 [shape = 'u32[144,128]{1,0:T(1,128)}', space=vmem, size = 0x12000, scoped, tag = 'internal scratch']
  #allocation2 [shape = 'f32[8,128]{1,0:T(8,128)}', space=vmem, size = 0x1000, scoped, tag = 'scratch operand']
  #allocation8 [shape = 's32[]', space=sflag, size = 0x4, offset = 0, fixed_abs, tag = 'sflag constant byte address 0x0 - dummy sync flag']
  %s0 = inlined_call_operand.hbm [shape: bf16[16,512,128], index: 0, kind: input, shape index: {}]
  %s1 = inlined_call_operand.hbm [shape: f32[16,512], index: 1, kind: input, shape index: {}]
  %s2 = inlined_call_operand.vmem [shape: f32[16,1], index: 2, kind: input, shape index: {}]
  %s3 = inlined_call_operand.vmem [shape: f32[128,8], index: 3, kind: input, shape index: {}]
  %s4 = inlined_call_operand.hbm [shape: f32[1,8], index: 4, kind: input, shape index: {}]
  %s5 = inlined_call_operand.vmem [shape: f32[16,8], index: 5, kind: output, shape index: {0}]
  %s6 = inlined_call_operand.vmem [shape: f32[16,8], index: 6, kind: output, shape index: {1}]
  %s7 = inlined_call_operand.vmem [shape: s32[16,1], index: 7, kind: output, shape index: {2}]
  %8 = xla_tuple %s5, %s6, %s7
  %s9 = sld [smem:[#allocation0]]
  $region89: #{tpu_custom_call.1} parent=0
    _
  %s11 = ssub.s32 1, %s9
  %s12 = scalar_select 0, %s11, %s9
  $region1: #{tpu_custom_call.1} parent=0
    #allocation3 [shape = 'u8[1048576]{0}', space=vmem, size = 0x100000, scoped, tag = 'input window, operand 0']
    #allocation4 [shape = 's32[2]{0}', space=sflag, size = 0x8, scoped, tag = 'scoped memory for tpu_custom_call.1']
    #allocation5 [shape = 'u8[16384]{0}', space=vmem, size = 0x4000, scoped, tag = 'input window, operand 1']
    #allocation6 [shape = 's32[2]{0}', space=sflag, size = 0x8, scoped, tag = 'scoped memory for tpu_custom_call.1']
    #allocation7 [shape = 'u8[512]{0}', space=vmem, size = 0x400, scoped, tag = 'input window, operand 4, single buffered']
    %13 = vsyncpa [#allocation4], 0
    %s14 = scalar_lea.sflag [#allocation4], 1
    %15 = vsyncpa %s14, 0
    %16 = vsyncpa [#allocation6], 0
    %s17 = scalar_lea.sflag [#allocation6], 1
    %18 = vsyncpa %s17, 0
    loop: start=0, step=1, limit=6
    $region2: #{tpu_custom_call.1} parent=1 // loop_pre_header
      _
    $region3: #{tpu_custom_call.1} parent=1 // loop_header
      %s20 = sphi 0, %s24
      %p21 = scmp.ge.s32.totalorder %s20, 6
      %s27 = sphi 0, %s39
      %s28 = sphi 0, %s35
      %s29 = sphi 0, %s27
      %s30 = sphi 0, %s28
      %s31 = sphi 0, %s29
      %s32 = sphi 0, %s30
      %s44 = sphi 0, %s46
      %s47 = sphi 0, %s44
      %s48 = sphi 0, %s47
      %s64 = sphi 0, %s48
      %s72 = sphi 0, %s74
      %s75 = sphi 0, %s72
      %s76 = sphi 0, %s75
      %s92 = sphi 0, %s76
      %s98 = sphi 0, %s100
      %s101 = sphi 0, %s98
      %s102 = sphi 0, %s101
      %s118 = sphi 0, %s102
      %s122 = sphi 0, %s122
      %s124 = sphi 0, %s122
      %s125 = sphi 0, %s124
      %s139 = sphi 0, %s125
      %s143 = sphi 0, %s143
      %s145 = sphi 0, %s143
      %s146 = sphi 0, %s145
      %s160 = sphi 0, %s146
      %s166 = sphi 0, %s168
      %s169 = sphi 0, %s166
      %s170 = sphi 0, %s169
      %s186 = sphi 0, %s170
      %s192 = sphi 0, %s194
      %s195 = sphi 0, %s192
      %s196 = sphi 0, %s195
      %s212 = sphi 0, %s196
      %s218 = sphi 0, %s220
      %s221 = sphi 0, %s218
      %s222 = sphi 0, %s221
      %s238 = sphi 0, %s222
    $region4: #{tpu_custom_call.1} parent=1 // loop_header_branch
      %23 = sbr.rel (%p21) target = $region8
    $region5: #{tpu_custom_call.1} parent=1 // loop_body
      %s25 = ssub.s32 %s20, 1
      %s26 = ssub.s32 %s20, 2
      %s33 = sadd.s32 1, %s28
      %p34 = scmp.ge.s32.totalorder %s33, 2
      %s35 = scalar_select %p34, 0, %s33
      %s36 = sadd.s32 1, %s27
      %s37 = scalar_select %p34, %s36, %s27
      %p38 = scmp.ge.s32.totalorder %s37, 2
      %s39 = scalar_select %p38, 0, %s37
      %s40 = ssub.s32 %s27, %s39
      %s41 = ssub.s32 %s28, %s35
      %s42 = sor.u32 %s40, %s41
      %p43 = scmp.eq.s32.totalorder %s42, 0
      %s45 = sadd.s32 %s44, 1
      %s46 = scalar_select %p43, %s44, %s45
      %p49 = pneg %p43
      %p50 = scmp.eq.s32.totalorder %s20, 3
      %p51 = por %p49, %p50
      %p52 = scmp.ne.s32.totalorder %s44, %s47
      %p53 = scmp.eq.s32.totalorder %s20, 0
      %p54 = por %p52, %p53
      %p55 = scmp.ne.s32.totalorder %s44, %s47
      %p56 = scmp.eq.s32.totalorder %s25, 3
      %p57 = por %p55, %p56
      %p58 = scmp.ne.s32.totalorder %s47, %s48
      %p59 = scmp.eq.s32.totalorder %s25, 0
      %p60 = por %p58, %p59
      %p61 = scmp.ne.s32.totalorder %s47, %s48
      %p62 = scmp.eq.s32.totalorder %s26, 3
      %p63 = por %p61, %p62
      %p65 = scmp.ne.s32.totalorder %s48, %s64
      %p66 = scmp.eq.s32.totalorder %s26, 0
      %p67 = por %p65, %p66
      %s68 = ssub.s32 %s27, %s39
      %s69 = ssub.s32 %s28, %s35
      %s70 = sor.u32 %s68, %s69
      %p71 = scmp.eq.s32.totalorder %s70, 0
      %s73 = sadd.s32 %s72, 1
      %s74 = scalar_select %p71, %s72, %s73
      %p77 = pneg %p71
      %p78 = scmp.eq.s32.totalorder %s20, 3
      %p79 = por %p77, %p78
      %p80 = scmp.ne.s32.totalorder %s72, %s75
      %p81 = scmp.eq.s32.totalorder %s20, 0
      %p82 = por %p80, %p81
      %p83 = scmp.ne.s32.totalorder %s72, %s75
      %p84 = scmp.eq.s32.totalorder %s25, 3
      %p85 = por %p83, %p84
      %p86 = scmp.ne.s32.totalorder %s75, %s76
      %p87 = scmp.eq.s32.totalorder %s25, 0
      %p88 = por %p86, %p87
      %p89 = scmp.ne.s32.totalorder %s75, %s76
      %p90 = scmp.eq.s32.totalorder %s26, 3
      %p91 = por %p89, %p90
      %p93 = scmp.ne.s32.totalorder %s76, %s92
      %p94 = scmp.eq.s32.totalorder %s26, 0
      %p95 = por %p93, %p94
      %s96 = ssub.s32 %s27, %s39
      %p97 = scmp.eq.s32.totalorder %s96, 0
      %s99 = sadd.s32 %s98, 1
      %s100 = scalar_select %p97, %s98, %s99
      %p103 = pneg %p97
      %p104 = scmp.eq.s32.totalorder %s20, 3
      %p105 = por %p103, %p104
      %p106 = scmp.ne.s32.totalorder %s98, %s101
      %p107 = scmp.eq.s32.totalorder %s20, 0
      %p108 = por %p106, %p107
      %p109 = scmp.ne.s32.totalorder %s98, %s101
      %p110 = scmp.eq.s32.totalorder %s25, 3
      %p111 = por %p109, %p110
      %p112 = scmp.ne.s32.totalorder %s101, %s102
      %p113 = scmp.eq.s32.totalorder %s25, 0
      %p114 = por %p112, %p113
      %p115 = scmp.ne.s32.totalorder %s101, %s102
      %p116 = scmp.eq.s32.totalorder %s26, 3
      %p117 = por %p115, %p116
      %p119 = scmp.ne.s32.totalorder %s102, %s118
      %p120 = scmp.eq.s32.totalorder %s26, 0
      %p121 = por %p119, %p120
      %s123 = sadd.s32 %s122, 1
      %p126 = scmp.eq.s32.totalorder %s20, 3
      %p127 = scmp.ne.s32.totalorder %s122, %s124
      %p128 = scmp.eq.s32.totalorder %s20, 0
      %p129 = por %p127, %p128
      %p130 = scmp.ne.s32.totalorder %s122, %s124
      %p131 = scmp.eq.s32.totalorder %s25, 3
      %p132 = por %p130, %p131
      %p133 = scmp.ne.s32.totalorder %s124, %s125
      %p134 = scmp.eq.s32.totalorder %s25, 0
      %p135 = por %p133, %p134
      %p136 = scmp.ne.s32.totalorder %s124, %s125
      %p137 = scmp.eq.s32.totalorder %s26, 3
      %p138 = por %p136, %p137
      %p140 = scmp.ne.s32.totalorder %s125, %s139
      %p141 = scmp.eq.s32.totalorder %s26, 0
      %p142 = por %p140, %p141
      %s144 = sadd.s32 %s143, 1
      %p147 = scmp.eq.s32.totalorder %s20, 3
      %p148 = scmp.ne.s32.totalorder %s143, %s145
      %p149 = scmp.eq.s32.totalorder %s20, 0
      %p150 = por %p148, %p149
      %p151 = scmp.ne.s32.totalorder %s143, %s145
      %p152 = scmp.eq.s32.totalorder %s25, 3
      %p153 = por %p151, %p152
      %p154 = scmp.ne.s32.totalorder %s145, %s146
      %p155 = scmp.eq.s32.totalorder %s25, 0
      %p156 = por %p154, %p155
      %p157 = scmp.ne.s32.totalorder %s145, %s146
      %p158 = scmp.eq.s32.totalorder %s26, 3
      %p159 = por %p157, %p158
      %p161 = scmp.ne.s32.totalorder %s146, %s160
      %p162 = scmp.eq.s32.totalorder %s26, 0
      %p163 = por %p161, %p162
      %s164 = ssub.s32 %s27, %s39
      %p165 = scmp.eq.s32.totalorder %s164, 0
      %s167 = sadd.s32 %s166, 1
      %s168 = scalar_select %p165, %s166, %s167
      %p171 = pneg %p165
      %p172 = scmp.eq.s32.totalorder %s20, 3
      %p173 = por %p171, %p172
      %p174 = scmp.ne.s32.totalorder %s166, %s169
      %p175 = scmp.eq.s32.totalorder %s20, 0
      %p176 = por %p174, %p175
      %p177 = scmp.ne.s32.totalorder %s166, %s169
      %p178 = scmp.eq.s32.totalorder %s25, 3
      %p179 = por %p177, %p178
      %p180 = scmp.ne.s32.totalorder %s169, %s170
      %p181 = scmp.eq.s32.totalorder %s25, 0
      %p182 = por %p180, %p181
      %p183 = scmp.ne.s32.totalorder %s169, %s170
      %p184 = scmp.eq.s32.totalorder %s26, 3
      %p185 = por %p183, %p184
      %p187 = scmp.ne.s32.totalorder %s170, %s186
      %p188 = scmp.eq.s32.totalorder %s26, 0
      %p189 = por %p187, %p188
      %s190 = ssub.s32 %s27, %s39
      %p191 = scmp.eq.s32.totalorder %s190, 0
      %s193 = sadd.s32 %s192, 1
      %s194 = scalar_select %p191, %s192, %s193
      %p197 = pneg %p191
      %p198 = scmp.eq.s32.totalorder %s20, 3
      %p199 = por %p197, %p198
      %p200 = scmp.ne.s32.totalorder %s192, %s195
      %p201 = scmp.eq.s32.totalorder %s20, 0
      %p202 = por %p200, %p201
      %p203 = scmp.ne.s32.totalorder %s192, %s195
      %p204 = scmp.eq.s32.totalorder %s25, 3
      %p205 = por %p203, %p204
      %p206 = scmp.ne.s32.totalorder %s195, %s196
      %p207 = scmp.eq.s32.totalorder %s25, 0
      %p208 = por %p206, %p207
      %p209 = scmp.ne.s32.totalorder %s195, %s196
      %p210 = scmp.eq.s32.totalorder %s26, 3
      %p211 = por %p209, %p210
      %p213 = scmp.ne.s32.totalorder %s196, %s212
      %p214 = scmp.eq.s32.totalorder %s26, 0
      %p215 = por %p213, %p214
      %s216 = ssub.s32 %s27, %s39
      %p217 = scmp.eq.s32.totalorder %s216, 0
      %s219 = sadd.s32 %s218, 1
      %s220 = scalar_select %p217, %s218, %s219
      %p223 = pneg %p217
      %p224 = scmp.eq.s32.totalorder %s20, 3
      %p225 = por %p223, %p224
      %p226 = scmp.ne.s32.totalorder %s218, %s221
      %p227 = scmp.eq.s32.totalorder %s20, 0
      %p228 = por %p226, %p227
      %p229 = scmp.ne.s32.totalorder %s218, %s221
      %p230 = scmp.eq.s32.totalorder %s25, 3
      %p231 = por %p229, %p230
      %p232 = scmp.ne.s32.totalorder %s221, %s222
      %p233 = scmp.eq.s32.totalorder %s25, 0
      %p234 = por %p232, %p233
      %p235 = scmp.ne.s32.totalorder %s221, %s222
      %p236 = scmp.eq.s32.totalorder %s26, 3
      %p237 = por %p235, %p236
      %p239 = scmp.ne.s32.totalorder %s222, %s238
      %p240 = scmp.eq.s32.totalorder %s26, 0
      %p241 = por %p239, %p240
      %p242 = scmp.le.s32.totalorder 1, %s20
      %p243 = scmp.lt.s32.totalorder %s20, 5
      %p244 = pnand %p242, %p243
      %p245 = pneg %p244
      // Predicated region
      $region9: #{tpu_custom_call.1} parent=5 // pred_check
        _
      $region10: #{tpu_custom_call.1} parent=5 // pred_check_branch
        %247 = sbr.rel (%p244) target = $region12
      $region11: #{tpu_custom_call.1} parent=5 // pred_region
        %s248 = ssub.s32 %s20, 1
        // Predicated region
        $region13: #{tpu_custom_call.1} parent=11 // pred_check
          %p249 = pneg %p135
        $region14: #{tpu_custom_call.1} parent=11 // pred_check_branch
          %251 = sbr.rel (%p249) target = $region16
        $region15: #{tpu_custom_call.1} parent=11 // pred_region
          _
        $region16: #{tpu_custom_call.1} parent=11 // pred_fallthru
          _
        // Predicated region
        $region17: #{tpu_custom_call.1} parent=11 // pred_check
          %p252 = pneg %p156
        $region18: #{tpu_custom_call.1} parent=11 // pred_check_branch
          %254 = sbr.rel (%p252) target = $region20
        $region19: #{tpu_custom_call.1} parent=11 // pred_region
          %s256 = ssub.s32 16, 16
          %257 = vsyncadd [#allocation6], %s256
          %s259 = sshll.u32 [#allocation7], 4
          %s260 = int_to_ptr.vmem [resolvable:$true] %s259
          %262 = dma.hbm_to_vmem [thread:$0]  %s4, 16, %s260, [#allocation6]
        $region20: #{tpu_custom_call.1} parent=11 // pred_fallthru
          _
      $region12: #{tpu_custom_call.1} parent=5 // pred_fallthru
        _
      %p263 = scmp.lt.s32.totalorder %s20, 4
      // Predicated region
      $region21: #{tpu_custom_call.1} parent=5 // pred_check
        %p264 = pneg %p263
      $region22: #{tpu_custom_call.1} parent=5 // pred_check_branch
        %266 = sbr.rel (%p264) target = $region24
      $region23: #{tpu_custom_call.1} parent=5 // pred_region
        // Predicated region
        $region25: #{tpu_custom_call.1} parent=23 // pred_check
          %p267 = pneg %p54
        $region26: #{tpu_custom_call.1} parent=23 // pred_check_branch
          %269 = sbr.rel (%p267) target = $region28
        $region27: #{tpu_custom_call.1} parent=23 // pred_region
          #allocation9 [shape = 'u32[6]{0}', space=smem, size = 0x18, scoped, tag = 'DMA stride descriptor']
          %s270 = sand.u32 %s44, 1
          %s271 = scalar_lea.sflag [#allocation4], %s270
          %s272 = sand.u32 %s44, 1
          %s273 = smul.addr %s272, 1024
          %s274 = scalar_lea.vmem [#allocation3], %s273
          %s275 = smul.u32 8, %s27
          %s276 = smul.u32 32, %s28
          %s278 = ssub.s32 16384, 16384
          %279 = vsyncadd %s271, %s278
          %s280 = smul.addr %s275, 64
          %s281 = sadd.s32 %s276, %s280
          %s282 = smul.addr %s281, 64
          %s283 = scalar_lea.hbm %s0, %s282
          %s285 = sshll.u32 1, 14
          %s286 = sxor.u32 4294967295, %s285
          %s288 = sld [smem:[#allocation0]]
          %s289 = sadd.s32 2, %s288
          %s291 = sshll.u32 7, 26
          %s292 = sxor.u32 4294967295, %s291
          %s293 = sand.u32 0, %s292
          %s294 = sshll.u32 %s289, 26
          %s295 = sor.u32 %s293, %s294
          %s296 = sshll.u32 %s274, 4
          %s297 = int_to_ptr.vmem [resolvable:$true] %s296
          %303 = sst [smem:[#allocation9]] 4096
          %s304 = scalar_lea.smem [#allocation9], 1
          %305 = sst [smem:[%s304]] 2048
          %s306 = scalar_lea.smem [#allocation9], 2
          %307 = sst [smem:[%s306]] 32
          %s308 = scalar_lea.smem [#allocation9], 3
          %309 = sst [smem:[%s308]] 64
          %s310 = scalar_lea.smem [#allocation9], 4
          %311 = sst [smem:[%s310]] 64
          %s312 = scalar_lea.smem [#allocation9], 5
          %313 = sst [smem:[%s312]] 4
          %315 = dma.general %s283, 16384, %s297, %s271, [#allocation8], [#allocation9], %s295, 0
        $region28: #{tpu_custom_call.1} parent=23 // pred_fallthru
          _
        // Predicated region
        $region29: #{tpu_custom_call.1} parent=23 // pred_check
          %p316 = pneg %p82
        $region30: #{tpu_custom_call.1} parent=23 // pred_check_branch
          %318 = sbr.rel (%p316) target = $region32
        $region31: #{tpu_custom_call.1} parent=23 // pred_region
          %s319 = sand.u32 %s20, 1
          %s320 = scalar_lea.sflag [#allocation6], %s319
          %s321 = sand.u32 %s72, 1
          %s322 = smul.addr %s321, 16
          %s323 = scalar_lea.vmem [#allocation5], %s322
          %s324 = smul.u32 2, %s28
          %s326 = ssub.s32 256, 256
          %327 = vsyncadd %s320, %s326
          %s328 = smul.addr %s27, 4
          %s329 = sadd.s32 %s324, %s328
          %s330 = smul.addr %s329, 128
          %s331 = scalar_lea.hbm %s1, %s330
          %s333 = sshll.u32 %s323, 4
          %s334 = int_to_ptr.vmem [resolvable:$true] %s333
          %336 = dma.hbm_to_vmem [thread:$0]  %s331, 256, %s334, %s320
        $region32: #{tpu_custom_call.1} parent=23 // pred_fallthru
          _
        // Predicated region
        $region33: #{tpu_custom_call.1} parent=23 // pred_check
          %p337 = pneg %p108
        $region34: #{tpu_custom_call.1} parent=23 // pred_check_branch
          %339 = sbr.rel (%p337) target = $region36
        $region35: #{tpu_custom_call.1} parent=23 // pred_region
          %p340 = scmp.lt.s32.totalorder %s27, 1
          %s341 = scalar_select %p340, %s27, 1
          %s342 = smul.addr %s341, 8
          %s343 = scalar_lea.vmem %s2, %s342
        $region36: #{tpu_custom_call.1} parent=23 // pred_fallthru
          _
      $region24: #{tpu_custom_call.1} parent=5 // pred_fallthru
        _
      %p344 = scmp.le.s32.totalorder 1, %s20
      %p345 = scmp.lt.s32.totalorder %s20, 5
      %p346 = pnand %p344, %p345
      %p347 = pneg %p346
      // Predicated region
      $region37: #{tpu_custom_call.1} parent=5 // pred_check
        _
      $region38: #{tpu_custom_call.1} parent=5 // pred_check_branch
        %349 = sbr.rel (%p346) target = $region40
      $region39: #{tpu_custom_call.1} parent=5 // pred_region
        %s350 = ssub.s32 %s20, 1
        %s351 = sand.u32 %s47, 1
        %s352 = scalar_lea.sflag [#allocation4], %s351
        %s353 = sand.u32 %s47, 1
        %s354 = smul.addr %s353, 1024
        %s355 = scalar_lea.vmem [#allocation3], %s354
        // Predicated region
        $region41: #{tpu_custom_call.1} parent=39 // pred_check
          %p356 = pneg %p60
        $region42: #{tpu_custom_call.1} parent=39 // pred_check_branch
          %358 = sbr.rel (%p356) target = $region44
        $region43: #{tpu_custom_call.1} parent=39 // pred_region
          %359 = dma.done %s352, 16384
        $region44: #{tpu_custom_call.1} parent=39 // pred_fallthru
          _
        %s360 = sand.u32 %s25, 1
        %s361 = scalar_lea.sflag [#allocation6], %s360
        %s362 = sand.u32 %s75, 1
        %s363 = smul.addr %s362, 16
        %s364 = scalar_lea.vmem [#allocation5], %s363
        // Predicated region
        $region45: #{tpu_custom_call.1} parent=39 // pred_check
          %p365 = pneg %p88
        $region46: #{tpu_custom_call.1} parent=39 // pred_check_branch
          %367 = sbr.rel (%p365) target = $region48
        $region47: #{tpu_custom_call.1} parent=39 // pred_region
          %368 = dma.done %s361, 256
        $region48: #{tpu_custom_call.1} parent=39 // pred_fallthru
          _
        // Predicated region
        $region49: #{tpu_custom_call.1} parent=39 // pred_check
          %p369 = pneg %p156
        $region50: #{tpu_custom_call.1} parent=39 // pred_check_branch
          %371 = sbr.rel (%p369) target = $region52
        $region51: #{tpu_custom_call.1} parent=39 // pred_region
          %372 = dma.done [#allocation6], 16
        $region52: #{tpu_custom_call.1} parent=39 // pred_fallthru
          _
        %s373 = sand.u32 %s47, 1
        %s374 = scalar_lea.sflag [#allocation4], %s373
        %s375 = sand.u32 %s47, 1
        %s376 = smul.addr %s375, 1024
        %s377 = scalar_lea.vmem [#allocation3], %s376
        %p378 = pneg %p60
        %p379 = pneg %p57
        %s380 = sand.u32 %s25, 1
        %s381 = scalar_lea.sflag [#allocation6], %s380
        %s382 = sand.u32 %s75, 1
        %s383 = smul.addr %s382, 16
        %s384 = scalar_lea.vmem [#allocation5], %s383
        %p385 = pneg %p88
        %p386 = pneg %p85
        %p387 = scmp.lt.s32.totalorder %s29, 1
        %s388 = scalar_select %p387, %s29, 1
        %s389 = smul.addr %s388, 8
        %s390 = scalar_lea.vmem %s2, %s389
        %p391 = pneg %p114
        %p392 = pneg %p111
        %p393 = pneg %p135
        %p394 = pneg %p132
        %p395 = pneg %p156
        %p396 = pneg %p153
        %p397 = pneg %p182
        %p398 = pneg %p179
        %p399 = scmp.lt.s32.totalorder %s29, 1
        %s400 = scalar_select %p399, %s29, 1
        %s401 = smul.addr %s400, 8
        %s402 = scalar_lea.vmem %s5, %s401
        %p403 = pneg %p208
        %p404 = pneg %p205
        %p405 = scmp.lt.s32.totalorder %s29, 1
        %s406 = scalar_select %p405, %s29, 1
        %s407 = smul.addr %s406, 8
        %s408 = scalar_lea.vmem %s6, %s407
        %p409 = pneg %p234
        %p410 = pneg %p231
        %p411 = scmp.lt.s32.totalorder %s29, 1
        %s412 = scalar_select %p411, %s29, 1
        %s413 = smul.addr %s412, 8
        %s414 = scalar_lea.vmem %s7, %s413
        %s415 = smul.u32 8, %s29
        %s416 = smul.u32 32, %s30
        %s417 = smul.u32 2, %s30
        %p418 = scmp.lt.s32.totalorder %s29, 1
        %s419 = scalar_select %p418, %s29, 1
        %s420 = smul.addr %s419, 8
        %s421 = scalar_lea.vmem %s2, %s420
        %p422 = scmp.lt.s32.totalorder %s29, 1
        %s423 = scalar_select %p422, %s29, 1
        %s424 = smul.addr %s423, 8
        %s425 = scalar_lea.vmem %s5, %s424
        %p426 = scmp.lt.s32.totalorder %s29, 1
        %s427 = scalar_select %p426, %s29, 1
        %s428 = smul.addr %s427, 8
        %s429 = scalar_lea.vmem %s6, %s428
        %p430 = scmp.lt.s32.totalorder %s29, 1
        %s431 = scalar_select %p430, %s29, 1
        %s432 = smul.addr %s431, 8
        %s433 = scalar_lea.vmem %s7, %s432
        %p434 = scmp.eq.s32.totalorder %s30, 0
        // Predicated region
        $region53: #{tpu_custom_call.1} parent=39 // pred_check
          %p435 = pneg %p434
        $region54: #{tpu_custom_call.1} parent=39 // pred_check_branch
          %437 = sbr.rel (%p435) target = $region56
        $region55: #{tpu_custom_call.1} parent=39 // pred_region
          %438 = vst [vmem:[#allocation2] sm:$0xff] 0.0
        $region56: #{tpu_custom_call.1} parent=39 // pred_fallthru
          _
        %v439 = vld [vmem:[%s355] sm:$0xf]
        %v440 = vld [vmem:[%s355 + $0x4] sm:$0xf]
        %v441 = vld [vmem:[%s355 + $0x8] sm:$0xf]
        %v442 = vld [vmem:[%s355 + $0xc] sm:$0xf]
        %v443 = vld [vmem:[%s355 + $0x10] sm:$0xf]
        %v444 = vld [vmem:[%s355 + $0x14] sm:$0xf]
        %v445 = vld [vmem:[%s355 + $0x18] sm:$0xf]
        %v446 = vld [vmem:[%s355 + $0x1c] sm:$0xf]
        %v447 = vld [vmem:[%s355 + $0x20] sm:$0xf]
        %v448 = vld [vmem:[%s355 + $0x24] sm:$0xf]
        %v449 = vld [vmem:[%s355 + $0x28] sm:$0xf]
        %v450 = vld [vmem:[%s355 + $0x2c] sm:$0xf]
        %v451 = vld [vmem:[%s355 + $0x30] sm:$0xf]
        %v452 = vld [vmem:[%s355 + $0x34] sm:$0xf]
        %v453 = vld [vmem:[%s355 + $0x38] sm:$0xf]
        %v454 = vld [vmem:[%s355 + $0x3c] sm:$0xf]
        %v455 = vld [vmem:[%s355 + $0x40] sm:$0xf]
        %v456 = vld [vmem:[%s355 + $0x44] sm:$0xf]
        %v457 = vld [vmem:[%s355 + $0x48] sm:$0xf]
        %v458 = vld [vmem:[%s355 + $0x4c] sm:$0xf]
        %v459 = vld [vmem:[%s355 + $0x50] sm:$0xf]
        %v460 = vld [vmem:[%s355 + $0x54] sm:$0xf]
        %v461 = vld [vmem:[%s355 + $0x58] sm:$0xf]
        %v462 = vld [vmem:[%s355 + $0x5c] sm:$0xf]
        %v463 = vld [vmem:[%s355 + $0x60] sm:$0xf]
        %v464 = vld [vmem:[%s355 + $0x64] sm:$0xf]
        %v465 = vld [vmem:[%s355 + $0x68] sm:$0xf]
        %v466 = vld [vmem:[%s355 + $0x6c] sm:$0xf]
        %v467 = vld [vmem:[%s355 + $0x70] sm:$0xf]
        %v468 = vld [vmem:[%s355 + $0x74] sm:$0xf]
        %v469 = vld [vmem:[%s355 + $0x78] sm:$0xf]
        %v470 = vld [vmem:[%s355 + $0x7c] sm:$0xf]
        %v471 = vld [vmem:[%s355 + $0x80] sm:$0xf]
        %v472 = vld [vmem:[%s355 + $0x84] sm:$0xf]
        %v473 = vld [vmem:[%s355 + $0x88] sm:$0xf]
        %v474 = vld [vmem:[%s355 + $0x8c] sm:$0xf]
        %v475 = vld [vmem:[%s355 + $0x90] sm:$0xf]
        %v476 = vld [vmem:[%s355 + $0x94] sm:$0xf]
        %v477 = vld [vmem:[%s355 + $0x98] sm:$0xf]
        %v478 = vld [vmem:[%s355 + $0x9c] sm:$0xf]
        %v479 = vld [vmem:[%s355 + $0xa0] sm:$0xf]
        %v480 = vld [vmem:[%s355 + $0xa4] sm:$0xf]
        %v481 = vld [vmem:[%s355 + $0xa8] sm:$0xf]
        %v482 = vld [vmem:[%s355 + $0xac] sm:$0xf]
        %v483 = vld [vmem:[%s355 + $0xb0] sm:$0xf]
        %v484 = vld [vmem:[%s355 + $0xb4] sm:$0xf]
        %v485 = vld [vmem:[%s355 + $0xb8] sm:$0xf]
        %v486 = vld [vmem:[%s355 + $0xbc] sm:$0xf]
        %v487 = vld [vmem:[%s355 + $0xc0] sm:$0xf]
        %v488 = vld [vmem:[%s355 + $0xc4] sm:$0xf]
        %v489 = vld [vmem:[%s355 + $0xc8] sm:$0xf]
        %v490 = vld [vmem:[%s355 + $0xcc] sm:$0xf]
        %v491 = vld [vmem:[%s355 + $0xd0] sm:$0xf]
        %v492 = vld [vmem:[%s355 + $0xd4] sm:$0xf]
        %v493 = vld [vmem:[%s355 + $0xd8] sm:$0xf]
        %v494 = vld [vmem:[%s355 + $0xdc] sm:$0xf]
        %v495 = vld [vmem:[%s355 + $0xe0] sm:$0xf]
        %v496 = vld [vmem:[%s355 + $0xe4] sm:$0xf]
        %v497 = vld [vmem:[%s355 + $0xe8] sm:$0xf]
        %v498 = vld [vmem:[%s355 + $0xec] sm:$0xf]
        %v499 = vld [vmem:[%s355 + $0xf0] sm:$0xf]
        %v500 = vld [vmem:[%s355 + $0xf4] sm:$0xf]
        %v501 = vld [vmem:[%s355 + $0xf8] sm:$0xf]
        %v502 = vld [vmem:[%s355 + $0xfc] sm:$0xf]
        %v503 = vld [vmem:[%s355 + $0x100] sm:$0xf]
        %v504 = vld [vmem:[%s355 + $0x104] sm:$0xf]
        %v505 = vld [vmem:[%s355 + $0x108] sm:$0xf]
        %v506 = vld [vmem:[%s355 + $0x10c] sm:$0xf]
        %v507 = vld [vmem:[%s355 + $0x110] sm:$0xf]
        %v508 = vld [vmem:[%s355 + $0x114] sm:$0xf]
        %v509 = vld [vmem:[%s355 + $0x118] sm:$0xf]
        %v510 = vld [vmem:[%s355 + $0x11c] sm:$0xf]
        %v511 = vld [vmem:[%s355 + $0x120] sm:$0xf]
        %v512 = vld [vmem:[%s355 + $0x124] sm:$0xf]
        %v513 = vld [vmem:[%s355 + $0x128] sm:$0xf]
        %v514 = vld [vmem:[%s355 + $0x12c] sm:$0xf]
        %v515 = vld [vmem:[%s355 + $0x130] sm:$0xf]
        %v516 = vld [vmem:[%s355 + $0x134] sm:$0xf]
        %v517 = vld [vmem:[%s355 + $0x138] sm:$0xf]
        %v518 = vld [vmem:[%s355 + $0x13c] sm:$0xf]
        %v519 = vld [vmem:[%s355 + $0x140] sm:$0xf]
        %v520 = vld [vmem:[%s355 + $0x144] sm:$0xf]
        %v521 = vld [vmem:[%s355 + $0x148] sm:$0xf]
        %v522 = vld [vmem:[%s355 + $0x14c] sm:$0xf]
        %v523 = vld [vmem:[%s355 + $0x150] sm:$0xf]
        %v524 = vld [vmem:[%s355 + $0x154] sm:$0xf]
        %v525 = vld [vmem:[%s355 + $0x158] sm:$0xf]
        %v526 = vld [vmem:[%s355 + $0x15c] sm:$0xf]
        %v527 = vld [vmem:[%s355 + $0x160] sm:$0xf]
        %v528 = vld [vmem:[%s355 + $0x164] sm:$0xf]
        %v529 = vld [vmem:[%s355 + $0x168] sm:$0xf]
        %v530 = vld [vmem:[%s355 + $0x16c] sm:$0xf]
        %v531 = vld [vmem:[%s355 + $0x170] sm:$0xf]
        %v532 = vld [vmem:[%s355 + $0x174] sm:$0xf]
        %v533 = vld [vmem:[%s355 + $0x178] sm:$0xf]
        %v534 = vld [vmem:[%s355 + $0x17c] sm:$0xf]
        %v535 = vld [vmem:[%s355 + $0x180] sm:$0xf]
        %v536 = vld [vmem:[%s355 + $0x184] sm:$0xf]
        %v537 = vld [vmem:[%s355 + $0x188] sm:$0xf]
        %v538 = vld [vmem:[%s355 + $0x18c] sm:$0xf]
        %v539 = vld [vmem:[%s355 + $0x190] sm:$0xf]
        %v540 = vld [vmem:[%s355 + $0x194] sm:$0xf]
        %v541 = vld [vmem:[%s355 + $0x198] sm:$0xf]
        %v542 = vld [vmem:[%s355 + $0x19c] sm:$0xf]
        %v543 = vld [vmem:[%s355 + $0x1a0] sm:$0xf]
        %v544 = vld [vmem:[%s355 + $0x1a4] sm:$0xf]
        %v545 = vld [vmem:[%s355 + $0x1a8] sm:$0xf]
        %v546 = vld [vmem:[%s355 + $0x1ac] sm:$0xf]
        %v547 = vld [vmem:[%s355 + $0x1b0] sm:$0xf]
        %v548 = vld [vmem:[%s355 + $0x1b4] sm:$0xf]
        %v549 = vld [vmem:[%s355 + $0x1b8] sm:$0xf]
        %v550 = vld [vmem:[%s355 + $0x1bc] sm:$0xf]
        %v551 = vld [vmem:[%s355 + $0x1c0] sm:$0xf]
        %v552 = vld [vmem:[%s355 + $0x1c4] sm:$0xf]
        %v553 = vld [vmem:[%s355 + $0x1c8] sm:$0xf]
        %v554 = vld [vmem:[%s355 + $0x1cc] sm:$0xf]
        %v555 = vld [vmem:[%s355 + $0x1d0] sm:$0xf]
        %v556 = vld [vmem:[%s355 + $0x1d4] sm:$0xf]
        %v557 = vld [vmem:[%s355 + $0x1d8] sm:$0xf]
        %v558 = vld [vmem:[%s355 + $0x1dc] sm:$0xf]
        %v559 = vld [vmem:[%s355 + $0x1e0] sm:$0xf]
        %v560 = vld [vmem:[%s355 + $0x1e4] sm:$0xf]
        %v561 = vld [vmem:[%s355 + $0x1e8] sm:$0xf]
        %v562 = vld [vmem:[%s355 + $0x1ec] sm:$0xf]
        %v563 = vld [vmem:[%s355 + $0x1f0] sm:$0xf]
        %v564 = vld [vmem:[%s355 + $0x1f4] sm:$0xf]
        %v565 = vld [vmem:[%s355 + $0x1f8] sm:$0xf]
        %v566 = vld [vmem:[%s355 + $0x1fc] sm:$0xf]
        %v567 = vld [vmem:[%s355 + $0x200] sm:$0xf]
        %v568 = vld [vmem:[%s355 + $0x204] sm:$0xf]
        %v569 = vld [vmem:[%s355 + $0x208] sm:$0xf]
        %v570 = vld [vmem:[%s355 + $0x20c] sm:$0xf]
        %v571 = vld [vmem:[%s355 + $0x210] sm:$0xf]
        %v572 = vld [vmem:[%s355 + $0x214] sm:$0xf]
        %v573 = vld [vmem:[%s355 + $0x218] sm:$0xf]
        %v574 = vld [vmem:[%s355 + $0x21c] sm:$0xf]
        %v575 = vld [vmem:[%s355 + $0x220] sm:$0xf]
        %v576 = vld [vmem:[%s355 + $0x224] sm:$0xf]
        %v577 = vld [vmem:[%s355 + $0x228] sm:$0xf]
        %v578 = vld [vmem:[%s355 + $0x22c] sm:$0xf]
        %v579 = vld [vmem:[%s355 + $0x230] sm:$0xf]
        %v580 = vld [vmem:[%s355 + $0x234] sm:$0xf]
        %v581 = vld [vmem:[%s355 + $0x238] sm:$0xf]
        %v582 = vld [vmem:[%s355 + $0x23c] sm:$0xf]
        %v583 = vld [vmem:[%s355 + $0x240] sm:$0xf]
        %v584 = vld [vmem:[%s355 + $0x244] sm:$0xf]
        %v585 = vld [vmem:[%s355 + $0x248] sm:$0xf]
        %v586 = vld [vmem:[%s355 + $0x24c] sm:$0xf]
        %v587 = vld [vmem:[%s355 + $0x250] sm:$0xf]
        %v588 = vld [vmem:[%s355 + $0x254] sm:$0xf]
        %v589 = vld [vmem:[%s355 + $0x258] sm:$0xf]
        %v590 = vld [vmem:[%s355 + $0x25c] sm:$0xf]
        %v591 = vld [vmem:[%s355 + $0x260] sm:$0xf]
        %v592 = vld [vmem:[%s355 + $0x264] sm:$0xf]
        %v593 = vld [vmem:[%s355 + $0x268] sm:$0xf]
        %v594 = vld [vmem:[%s355 + $0x26c] sm:$0xf]
        %v595 = vld [vmem:[%s355 + $0x270] sm:$0xf]
        %v596 = vld [vmem:[%s355 + $0x274] sm:$0xf]
        %v597 = vld [vmem:[%s355 + $0x278] sm:$0xf]
        %v598 = vld [vmem:[%s355 + $0x27c] sm:$0xf]
        %v599 = vld [vmem:[%s355 + $0x280] sm:$0xf]
        %v600 = vld [vmem:[%s355 + $0x284] sm:$0xf]
        %v601 = vld [vmem:[%s355 + $0x288] sm:$0xf]
        %v602 = vld [vmem:[%s355 + $0x28c] sm:$0xf]
        %v603 = vld [vmem:[%s355 + $0x290] sm:$0xf]
        %v604 = vld [vmem:[%s355 + $0x294] sm:$0xf]
        %v605 = vld [vmem:[%s355 + $0x298] sm:$0xf]
        %v606 = vld [vmem:[%s355 + $0x29c] sm:$0xf]
        %v607 = vld [vmem:[%s355 + $0x2a0] sm:$0xf]
        %v608 = vld [vmem:[%s355 + $0x2a4] sm:$0xf]
        %v609 = vld [vmem:[%s355 + $0x2a8] sm:$0xf]
        %v610 = vld [vmem:[%s355 + $0x2ac] sm:$0xf]
        %v611 = vld [vmem:[%s355 + $0x2b0] sm:$0xf]
        %v612 = vld [vmem:[%s355 + $0x2b4] sm:$0xf]
        %v613 = vld [vmem:[%s355 + $0x2b8] sm:$0xf]
        %v614 = vld [vmem:[%s355 + $0x2bc] sm:$0xf]
        %v615 = vld [vmem:[%s355 + $0x2c0] sm:$0xf]
        %v616 = vld [vmem:[%s355 + $0x2c4] sm:$0xf]
        %v617 = vld [vmem:[%s355 + $0x2c8] sm:$0xf]
        %v618 = vld [vmem:[%s355 + $0x2cc] sm:$0xf]
        %v619 = vld [vmem:[%s355 + $0x2d0] sm:$0xf]
        %v620 = vld [vmem:[%s355 + $0x2d4] sm:$0xf]
        %v621 = vld [vmem:[%s355 + $0x2d8] sm:$0xf]
        %v622 = vld [vmem:[%s355 + $0x2dc] sm:$0xf]
        %v623 = vld [vmem:[%s355 + $0x2e0] sm:$0xf]
        %v624 = vld [vmem:[%s355 + $0x2e4] sm:$0xf]
        %v625 = vld [vmem:[%s355 + $0x2e8] sm:$0xf]
        %v626 = vld [vmem:[%s355 + $0x2ec] sm:$0xf]
        %v627 = vld [vmem:[%s355 + $0x2f0] sm:$0xf]
        %v628 = vld [vmem:[%s355 + $0x2f4] sm:$0xf]
        %v629 = vld [vmem:[%s355 + $0x2f8] sm:$0xf]
        %v630 = vld [vmem:[%s355 + $0x2fc] sm:$0xf]
        %v631 = vld [vmem:[%s355 + $0x300] sm:$0xf]
        %v632 = vld [vmem:[%s355 + $0x304] sm:$0xf]
        %v633 = vld [vmem:[%s355 + $0x308] sm:$0xf]
        %v634 = vld [vmem:[%s355 + $0x30c] sm:$0xf]
        %v635 = vld [vmem:[%s355 + $0x310] sm:$0xf]
        %v636 = vld [vmem:[%s355 + $0x314] sm:$0xf]
        %v637 = vld [vmem:[%s355 + $0x318] sm:$0xf]
        %v638 = vld [vmem:[%s355 + $0x31c] sm:$0xf]
        %v639 = vld [vmem:[%s355 + $0x320] sm:$0xf]
        %v640 = vld [vmem:[%s355 + $0x324] sm:$0xf]
        %v641 = vld [vmem:[%s355 + $0x328] sm:$0xf]
        %v642 = vld [vmem:[%s355 + $0x32c] sm:$0xf]
        %v643 = vld [vmem:[%s355 + $0x330] sm:$0xf]
        %v644 = vld [vmem:[%s355 + $0x334] sm:$0xf]
        %v645 = vld [vmem:[%s355 + $0x338] sm:$0xf]
        %v646 = vld [vmem:[%s355 + $0x33c] sm:$0xf]
        %v647 = vld [vmem:[%s355 + $0x340] sm:$0xf]
        %v648 = vld [vmem:[%s355 + $0x344] sm:$0xf]
        %v649 = vld [vmem:[%s355 + $0x348] sm:$0xf]
        %v650 = vld [vmem:[%s355 + $0x34c] sm:$0xf]
        %v651 = vld [vmem:[%s355 + $0x350] sm:$0xf]
        %v652 = vld [vmem:[%s355 + $0x354] sm:$0xf]
        %v653 = vld [vmem:[%s355 + $0x358] sm:$0xf]
        %v654 = vld [vmem:[%s355 + $0x35c] sm:$0xf]
        %v655 = vld [vmem:[%s355 + $0x360] sm:$0xf]
        %v656 = vld [vmem:[%s355 + $0x364] sm:$0xf]
        %v657 = vld [vmem:[%s355 + $0x368] sm:$0xf]
        %v658 = vld [vmem:[%s355 + $0x36c] sm:$0xf]
        %v659 = vld [vmem:[%s355 + $0x370] sm:$0xf]
        %v660 = vld [vmem:[%s355 + $0x374] sm:$0xf]
        %v661 = vld [vmem:[%s355 + $0x378] sm:$0xf]
        %v662 = vld [vmem:[%s355 + $0x37c] sm:$0xf]
        %v663 = vld [vmem:[%s355 + $0x380] sm:$0xf]
        %v664 = vld [vmem:[%s355 + $0x384] sm:$0xf]
        %v665 = vld [vmem:[%s355 + $0x388] sm:$0xf]
        %v666 = vld [vmem:[%s355 + $0x38c] sm:$0xf]
        %v667 = vld [vmem:[%s355 + $0x390] sm:$0xf]
        %v668 = vld [vmem:[%s355 + $0x394] sm:$0xf]
        %v669 = vld [vmem:[%s355 + $0x398] sm:$0xf]
        %v670 = vld [vmem:[%s355 + $0x39c] sm:$0xf]
        %v671 = vld [vmem:[%s355 + $0x3a0] sm:$0xf]
        %v672 = vld [vmem:[%s355 + $0x3a4] sm:$0xf]
        %v673 = vld [vmem:[%s355 + $0x3a8] sm:$0xf]
        %v674 = vld [vmem:[%s355 + $0x3ac] sm:$0xf]
        %v675 = vld [vmem:[%s355 + $0x3b0] sm:$0xf]
        %v676 = vld [vmem:[%s355 + $0x3b4] sm:$0xf]
        %v677 = vld [vmem:[%s355 + $0x3b8] sm:$0xf]
        %v678 = vld [vmem:[%s355 + $0x3bc] sm:$0xf]
        %v679 = vld [vmem:[%s355 + $0x3c0] sm:$0xf]
        %v680 = vld [vmem:[%s355 + $0x3c4] sm:$0xf]
        %v681 = vld [vmem:[%s355 + $0x3c8] sm:$0xf]
        %v682 = vld [vmem:[%s355 + $0x3cc] sm:$0xf]
        %v683 = vld [vmem:[%s355 + $0x3d0] sm:$0xf]
        %v684 = vld [vmem:[%s355 + $0x3d4] sm:$0xf]
        %v685 = vld [vmem:[%s355 + $0x3d8] sm:$0xf]
        %v686 = vld [vmem:[%s355 + $0x3dc] sm:$0xf]
        %v687 = vld [vmem:[%s355 + $0x3e0] sm:$0xf]
        %v688 = vld [vmem:[%s355 + $0x3e4] sm:$0xf]
        %v689 = vld [vmem:[%s355 + $0x3e8] sm:$0xf]
        %v690 = vld [vmem:[%s355 + $0x3ec] sm:$0xf]
        %v691 = vld [vmem:[%s355 + $0x3f0] sm:$0xf]
        %v692 = vld [vmem:[%s355 + $0x3f4] sm:$0xf]
        %v693 = vld [vmem:[%s355 + $0x3f8] sm:$0xf]
        %v694 = vld [vmem:[%s355 + $0x3fc] sm:$0xf]
        %v695 = vld [vmem:[%s364] sm:$0xff]
        %v696 = vld [vmem:[%s364 + $0x8] sm:$0xff]
        %v697 = vld [vmem:[#allocation2] sm:$0xff]
        %v698 = vlaneseq
        %v699 = vshrl.u32 %v698, 7
        %v700 = vsub.s32 0, %v699
        %v701 = vrot.slane %v695, %v700
        %703 = vbcast.lane.b32.xlu0 %v701, 256
        %v704 = vpop.permute.xlu0 %703
        %s706 = sor.u32 256, 8
        %707 = vbcast.lane.b32.xlu0 %v701, %s706
        %v708 = vpop.permute.xlu0 %707
        %s710 = sor.u32 256, 16
        %711 = vbcast.lane.b32.xlu0 %v701, %s710
        %v712 = vpop.permute.xlu0 %711
        %s714 = sor.u32 256, 24
        %715 = vbcast.lane.b32.xlu0 %v701, %s714
        %v716 = vpop.permute.xlu0 %715
        %s718 = sor.u32 256, 32
        %719 = vbcast.lane.b32.xlu0 %v701, %s718
        %v720 = vpop.permute.xlu0 %719
        %s722 = sor.u32 256, 40
        %723 = vbcast.lane.b32.xlu0 %v701, %s722
        %v724 = vpop.permute.xlu0 %723
        %s726 = sor.u32 256, 48
        %727 = vbcast.lane.b32.xlu0 %v701, %s726
        %v728 = vpop.permute.xlu0 %727
        %s730 = sor.u32 256, 56
        %731 = vbcast.lane.b32.xlu0 %v701, %s730
        %v732 = vpop.permute.xlu0 %731
        %s734 = sor.u32 256, 64
        %735 = vbcast.lane.b32.xlu0 %v701, %s734
        %v736 = vpop.permute.xlu0 %735
        %s738 = sor.u32 256, 72
        %739 = vbcast.lane.b32.xlu0 %v701, %s738
        %v740 = vpop.permute.xlu0 %739
        %s742 = sor.u32 256, 80
        %743 = vbcast.lane.b32.xlu0 %v701, %s742
        %v744 = vpop.permute.xlu0 %743
        %s746 = sor.u32 256, 88
        %747 = vbcast.lane.b32.xlu0 %v701, %s746
        %v748 = vpop.permute.xlu0 %747
        %s750 = sor.u32 256, 96
        %751 = vbcast.lane.b32.xlu0 %v701, %s750
        %v752 = vpop.permute.xlu0 %751
        %s754 = sor.u32 256, 104
        %755 = vbcast.lane.b32.xlu0 %v701, %s754
        %v756 = vpop.permute.xlu0 %755
        %s758 = sor.u32 256, 112
        %759 = vbcast.lane.b32.xlu0 %v701, %s758
        %v760 = vpop.permute.xlu0 %759
        %s762 = sor.u32 256, 120
        %763 = vbcast.lane.b32.xlu0 %v701, %s762
        %v764 = vpop.permute.xlu0 %763
        %v765 = vlaneseq
        %v766 = vshrl.u32 %v765, 7
        %v767 = vsub.s32 0, %v766
        %v768 = vrot.slane %v696, %v767
        %770 = vbcast.lane.b32.xlu0 %v768, 256
        %v771 = vpop.permute.xlu0 %770
        %s773 = sor.u32 256, 8
        %774 = vbcast.lane.b32.xlu0 %v768, %s773
        %v775 = vpop.permute.xlu0 %774
        %s777 = sor.u32 256, 16
        %778 = vbcast.lane.b32.xlu0 %v768, %s777
        %v779 = vpop.permute.xlu0 %778
        %s781 = sor.u32 256, 24
        %782 = vbcast.lane.b32.xlu0 %v768, %s781
        %v783 = vpop.permute.xlu0 %782
        %s785 = sor.u32 256, 32
        %786 = vbcast.lane.b32.xlu0 %v768, %s785
        %v787 = vpop.permute.xlu0 %786
        %s789 = sor.u32 256, 40
        %790 = vbcast.lane.b32.xlu0 %v768, %s789
        %v791 = vpop.permute.xlu0 %790
        %s793 = sor.u32 256, 48
        %794 = vbcast.lane.b32.xlu0 %v768, %s793
        %v795 = vpop.permute.xlu0 %794
        %s797 = sor.u32 256, 56
        %798 = vbcast.lane.b32.xlu0 %v768, %s797
        %v799 = vpop.permute.xlu0 %798
        %s801 = sor.u32 256, 64
        %802 = vbcast.lane.b32.xlu0 %v768, %s801
        %v803 = vpop.permute.xlu0 %802
        %s805 = sor.u32 256, 72
        %806 = vbcast.lane.b32.xlu0 %v768, %s805
        %v807 = vpop.permute.xlu0 %806
        %s809 = sor.u32 256, 80
        %810 = vbcast.lane.b32.xlu0 %v768, %s809
        %v811 = vpop.permute.xlu0 %810
        %s813 = sor.u32 256, 88
        %814 = vbcast.lane.b32.xlu0 %v768, %s813
        %v815 = vpop.permute.xlu0 %814
        %s817 = sor.u32 256, 96
        %818 = vbcast.lane.b32.xlu0 %v768, %s817
        %v819 = vpop.permute.xlu0 %818
        %s821 = sor.u32 256, 104
        %822 = vbcast.lane.b32.xlu0 %v768, %s821
        %v823 = vpop.permute.xlu0 %822
        %s825 = sor.u32 256, 112
        %826 = vbcast.lane.b32.xlu0 %v768, %s825
        %v827 = vpop.permute.xlu0 %826
        %s829 = sor.u32 256, 120
        %830 = vbcast.lane.b32.xlu0 %v768, %s829
        %v831 = vpop.permute.xlu0 %830
        %v832 = vlaneseq
        %v833 = vshrl.u32 %v832, 7
        %v834 = vsub.s32 1, %v833
        %v835 = vrot.slane %v695, %v834
        %837 = vbcast.lane.b32.xlu0 %v835, 256
        %v838 = vpop.permute.xlu0 %837
        %s840 = sor.u32 256, 8
        %841 = vbcast.lane.b32.xlu0 %v835, %s840
        %v842 = vpop.permute.xlu0 %841
        %s844 = sor.u32 256, 16
        %845 = vbcast.lane.b32.xlu0 %v835, %s844
        %v846 = vpop.permute.xlu0 %845
        %s848 = sor.u32 256, 24
        %849 = vbcast.lane.b32.xlu0 %v835, %s848
        %v850 = vpop.permute.xlu0 %849
        %s852 = sor.u32 256, 32
        %853 = vbcast.lane.b32.xlu0 %v835, %s852
        %v854 = vpop.permute.xlu0 %853
        %s856 = sor.u32 256, 40
        %857 = vbcast.lane.b32.xlu0 %v835, %s856
        %v858 = vpop.permute.xlu0 %857
        %s860 = sor.u32 256, 48
        %861 = vbcast.lane.b32.xlu0 %v835, %s860
        %v862 = vpop.permute.xlu0 %861
        %s864 = sor.u32 256, 56
        %865 = vbcast.lane.b32.xlu0 %v835, %s864
        %v866 = vpop.permute.xlu0 %865
        %s868 = sor.u32 256, 64
        %869 = vbcast.lane.b32.xlu0 %v835, %s868
        %v870 = vpop.permute.xlu0 %869
        %s872 = sor.u32 256, 72
        %873 = vbcast.lane.b32.xlu0 %v835, %s872
        %v874 = vpop.permute.xlu0 %873
        %s876 = sor.u32 256, 80
        %877 = vbcast.lane.b32.xlu0 %v835, %s876
        %v878 = vpop.permute.xlu0 %877
        %s880 = sor.u32 256, 88
        %881 = vbcast.lane.b32.xlu0 %v835, %s880
        %v882 = vpop.permute.xlu0 %881
        %s884 = sor.u32 256, 96
        %885 = vbcast.lane.b32.xlu0 %v835, %s884
        %v886 = vpop.permute.xlu0 %885
        %s888 = sor.u32 256, 104
        %889 = vbcast.lane.b32.xlu0 %v835, %s888
        %v890 = vpop.permute.xlu0 %889
        %s892 = sor.u32 256, 112
        %893 = vbcast.lane.b32.xlu0 %v835, %s892
        %v894 = vpop.permute.xlu0 %893
        %s896 = sor.u32 256, 120
        %897 = vbcast.lane.b32.xlu0 %v835, %s896
        %v898 = vpop.permute.xlu0 %897
        %v899 = vlaneseq
        %v900 = vshrl.u32 %v899, 7
        %v901 = vsub.s32 1, %v900
        %v902 = vrot.slane %v696, %v901
        %904 = vbcast.lane.b32.xlu0 %v902, 256
        %v905 = vpop.permute.xlu0 %904
        %s907 = sor.u32 256, 8
        %908 = vbcast.lane.b32.xlu0 %v902, %s907
        %v909 = vpop.permute.xlu0 %908
        %s911 = sor.u32 256, 16
        %912 = vbcast.lane.b32.xlu0 %v902, %s911
        %v913 = vpop.permute.xlu0 %912
        %s915 = sor.u32 256, 24
        %916 = vbcast.lane.b32.xlu0 %v902, %s915
        %v917 = vpop.permute.xlu0 %916
        %s919 = sor.u32 256, 32
        %920 = vbcast.lane.b32.xlu0 %v902, %s919
        %v921 = vpop.permute.xlu0 %920
        %s923 = sor.u32 256, 40
        %924 = vbcast.lane.b32.xlu0 %v902, %s923
        %v925 = vpop.permute.xlu0 %924
        %s927 = sor.u32 256, 48
        %928 = vbcast.lane.b32.xlu0 %v902, %s927
        %v929 = vpop.permute.xlu0 %928
        %s931 = sor.u32 256, 56
        %932 = vbcast.lane.b32.xlu0 %v902, %s931
        %v933 = vpop.permute.xlu0 %932
        %s935 = sor.u32 256, 64
        %936 = vbcast.lane.b32.xlu0 %v902, %s935
        %v937 = vpop.permute.xlu0 %936
        %s939 = sor.u32 256, 72
        %940 = vbcast.lane.b32.xlu0 %v902, %s939
        %v941 = vpop.permute.xlu0 %940
        %s943 = sor.u32 256, 80
        %944 = vbcast.lane.b32.xlu0 %v902, %s943
        %v945 = vpop.permute.xlu0 %944
        %s947 = sor.u32 256, 88
        %948 = vbcast.lane.b32.xlu0 %v902, %s947
        %v949 = vpop.permute.xlu0 %948
        %s951 = sor.u32 256, 96
        %952 = vbcast.lane.b32.xlu0 %v902, %s951
        %v953 = vpop.permute.xlu0 %952
        %s955 = sor.u32 256, 104
        %956 = vbcast.lane.b32.xlu0 %v902, %s955
        %v957 = vpop.permute.xlu0 %956
        %s959 = sor.u32 256, 112
        %960 = vbcast.lane.b32.xlu0 %v902, %s959
        %v961 = vpop.permute.xlu0 %960
        %s963 = sor.u32 256, 120
        %964 = vbcast.lane.b32.xlu0 %v902, %s963
        %v965 = vpop.permute.xlu0 %964
        %v966 = vlaneseq
        %v967 = vshrl.u32 %v966, 7
        %v968 = vsub.s32 2, %v967
        %v969 = vrot.slane %v695, %v968
        %971 = vbcast.lane.b32.xlu0 %v969, 256
        %v972 = vpop.permute.xlu0 %971
        %s974 = sor.u32 256, 8
        %975 = vbcast.lane.b32.xlu0 %v969, %s974
        %v976 = vpop.permute.xlu0 %975
        %s978 = sor.u32 256, 16
        %979 = vbcast.lane.b32.xlu0 %v969, %s978
        %v980 = vpop.permute.xlu0 %979
        %s982 = sor.u32 256, 24
        %983 = vbcast.lane.b32.xlu0 %v969, %s982
        %v984 = vpop.permute.xlu0 %983
        %s986 = sor.u32 256, 32
        %987 = vbcast.lane.b32.xlu0 %v969, %s986
        %v988 = vpop.permute.xlu0 %987
        %s990 = sor.u32 256, 40
        %991 = vbcast.lane.b32.xlu0 %v969, %s990
        %v992 = vpop.permute.xlu0 %991
        %s994 = sor.u32 256, 48
        %995 = vbcast.lane.b32.xlu0 %v969, %s994
        %v996 = vpop.permute.xlu0 %995
        %s998 = sor.u32 256, 56
        %999 = vbcast.lane.b32.xlu0 %v969, %s998
        %v1000 = vpop.permute.xlu0 %999
        %s1002 = sor.u32 256, 64
        %1003 = vbcast.lane.b32.xlu0 %v969, %s1002
        %v1004 = vpop.permute.xlu0 %1003
        %s1006 = sor.u32 256, 72
        %1007 = vbcast.lane.b32.xlu0 %v969, %s1006
        %v1008 = vpop.permute.xlu0 %1007
        %s1010 = sor.u32 256, 80
        %1011 = vbcast.lane.b32.xlu0 %v969, %s1010
        %v1012 = vpop.permute.xlu0 %1011
        %s1014 = sor.u32 256, 88
        %1015 = vbcast.lane.b32.xlu0 %v969, %s1014
        %v1016 = vpop.permute.xlu0 %1015
        %s1018 = sor.u32 256, 96
        %1019 = vbcast.lane.b32.xlu0 %v969, %s1018
        %v1020 = vpop.permute.xlu0 %1019
        %s1022 = sor.u32 256, 104
        %1023 = vbcast.lane.b32.xlu0 %v969, %s1022
        %v1024 = vpop.permute.xlu0 %1023
        %s1026 = sor.u32 256, 112
        %1027 = vbcast.lane.b32.xlu0 %v969, %s1026
        %v1028 = vpop.permute.xlu0 %1027
        %s1030 = sor.u32 256, 120
        %1031 = vbcast.lane.b32.xlu0 %v969, %s1030
        %v1032 = vpop.permute.xlu0 %1031
        %v1033 = vlaneseq
        %v1034 = vshrl.u32 %v1033, 7
        %v1035 = vsub.s32 2, %v1034
        %v1036 = vrot.slane %v696, %v1035
        %1038 = vbcast.lane.b32.xlu0 %v1036, 256
        %v1039 = vpop.permute.xlu0 %1038
        %s1041 = sor.u32 256, 8
        %1042 = vbcast.lane.b32.xlu0 %v1036, %s1041
        %v1043 = vpop.permute.xlu0 %1042
        %s1045 = sor.u32 256, 16
        %1046 = vbcast.lane.b32.xlu0 %v1036, %s1045
        %v1047 = vpop.permute.xlu0 %1046
        %s1049 = sor.u32 256, 24
        %1050 = vbcast.lane.b32.xlu0 %v1036, %s1049
        %v1051 = vpop.permute.xlu0 %1050
        %s1053 = sor.u32 256, 32
        %1054 = vbcast.lane.b32.xlu0 %v1036, %s1053
        %v1055 = vpop.permute.xlu0 %1054
        %s1057 = sor.u32 256, 40
        %1058 = vbcast.lane.b32.xlu0 %v1036, %s1057
        %v1059 = vpop.permute.xlu0 %1058
        %s1061 = sor.u32 256, 48
        %1062 = vbcast.lane.b32.xlu0 %v1036, %s1061
        %v1063 = vpop.permute.xlu0 %1062
        %s1065 = sor.u32 256, 56
        %1066 = vbcast.lane.b32.xlu0 %v1036, %s1065
        %v1067 = vpop.permute.xlu0 %1066
        %s1069 = sor.u32 256, 64
        %1070 = vbcast.lane.b32.xlu0 %v1036, %s1069
        %v1071 = vpop.permute.xlu0 %1070
        %s1073 = sor.u32 256, 72
        %1074 = vbcast.lane.b32.xlu0 %v1036, %s1073
        %v1075 = vpop.permute.xlu0 %1074
        %s1077 = sor.u32 256, 80
        %1078 = vbcast.lane.b32.xlu0 %v1036, %s1077
        %v1079 = vpop.permute.xlu0 %1078
        %s1081 = sor.u32 256, 88
        %1082 = vbcast.lane.b32.xlu0 %v1036, %s1081
        %v1083 = vpop.permute.xlu0 %1082
        %s1085 = sor.u32 256, 96
        %1086 = vbcast.lane.b32.xlu0 %v1036, %s1085
        %v1087 = vpop.permute.xlu0 %1086
        %s1089 = sor.u32 256, 104
        %1090 = vbcast.lane.b32.xlu0 %v1036, %s1089
        %v1091 = vpop.permute.xlu0 %1090
        %s1093 = sor.u32 256, 112
        %1094 = vbcast.lane.b32.xlu0 %v1036, %s1093
        %v1095 = vpop.permute.xlu0 %1094
        %s1097 = sor.u32 256, 120
        %1098 = vbcast.lane.b32.xlu0 %v1036, %s1097
        %v1099 = vpop.permute.xlu0 %1098
        %v1100 = vlaneseq
        %v1101 = vshrl.u32 %v1100, 7
        %v1102 = vsub.s32 3, %v1101
        %v1103 = vrot.slane %v695, %v1102
        %1105 = vbcast.lane.b32.xlu0 %v1103, 256
        %v1106 = vpop.permute.xlu0 %1105
        %s1108 = sor.u32 256, 8
        %1109 = vbcast.lane.b32.xlu0 %v1103, %s1108
        %v1110 = vpop.permute.xlu0 %1109
        %s1112 = sor.u32 256, 16
        %1113 = vbcast.lane.b32.xlu0 %v1103, %s1112
        %v1114 = vpop.permute.xlu0 %1113
        %s1116 = sor.u32 256, 24
        %1117 = vbcast.lane.b32.xlu0 %v1103, %s1116
        %v1118 = vpop.permute.xlu0 %1117
        %s1120 = sor.u32 256, 32
        %1121 = vbcast.lane.b32.xlu0 %v1103, %s1120
        %v1122 = vpop.permute.xlu0 %1121
        %s1124 = sor.u32 256, 40
        %1125 = vbcast.lane.b32.xlu0 %v1103, %s1124
        %v1126 = vpop.permute.xlu0 %1125
        %s1128 = sor.u32 256, 48
        %1129 = vbcast.lane.b32.xlu0 %v1103, %s1128
        %v1130 = vpop.permute.xlu0 %1129
        %s1132 = sor.u32 256, 56
        %1133 = vbcast.lane.b32.xlu0 %v1103, %s1132
        %v1134 = vpop.permute.xlu0 %1133
        %s1136 = sor.u32 256, 64
        %1137 = vbcast.lane.b32.xlu0 %v1103, %s1136
        %v1138 = vpop.permute.xlu0 %1137
        %s1140 = sor.u32 256, 72
        %1141 = vbcast.lane.b32.xlu0 %v1103, %s1140
        %v1142 = vpop.permute.xlu0 %1141
        %s1144 = sor.u32 256, 80
        %1145 = vbcast.lane.b32.xlu0 %v1103, %s1144
        %v1146 = vpop.permute.xlu0 %1145
        %s1148 = sor.u32 256, 88
        %1149 = vbcast.lane.b32.xlu0 %v1103, %s1148
        %v1150 = vpop.permute.xlu0 %1149
        %s1152 = sor.u32 256, 96
        %1153 = vbcast.lane.b32.xlu0 %v1103, %s1152
        %v1154 = vpop.permute.xlu0 %1153
        %s1156 = sor.u32 256, 104
        %1157 = vbcast.lane.b32.xlu0 %v1103, %s1156
        %v1158 = vpop.permute.xlu0 %1157
        %s1160 = sor.u32 256, 112
        %1161 = vbcast.lane.b32.xlu0 %v1103, %s1160
        %v1162 = vpop.permute.xlu0 %1161
        %s1164 = sor.u32 256, 120
        %1165 = vbcast.lane.b32.xlu0 %v1103, %s1164
        %v1166 = vpop.permute.xlu0 %1165
        %v1167 = vlaneseq
        %v1168 = vshrl.u32 %v1167, 7
        %v1169 = vsub.s32 3, %v1168
        %v1170 = vrot.slane %v696, %v1169
        %1172 = vbcast.lane.b32.xlu0 %v1170, 256
        %v1173 = vpop.permute.xlu0 %1172
        %s1175 = sor.u32 256, 8
        %1176 = vbcast.lane.b32.xlu0 %v1170, %s1175
        %v1177 = vpop.permute.xlu0 %1176
        %s1179 = sor.u32 256, 16
        %1180 = vbcast.lane.b32.xlu0 %v1170, %s1179
        %v1181 = vpop.permute.xlu0 %1180
        %s1183 = sor.u32 256, 24
        %1184 = vbcast.lane.b32.xlu0 %v1170, %s1183
        %v1185 = vpop.permute.xlu0 %1184
        %s1187 = sor.u32 256, 32
        %1188 = vbcast.lane.b32.xlu0 %v1170, %s1187
        %v1189 = vpop.permute.xlu0 %1188
        %s1191 = sor.u32 256, 40
        %1192 = vbcast.lane.b32.xlu0 %v1170, %s1191
        %v1193 = vpop.permute.xlu0 %1192
        %s1195 = sor.u32 256, 48
        %1196 = vbcast.lane.b32.xlu0 %v1170, %s1195
        %v1197 = vpop.permute.xlu0 %1196
        %s1199 = sor.u32 256, 56
        %1200 = vbcast.lane.b32.xlu0 %v1170, %s1199
        %v1201 = vpop.permute.xlu0 %1200
        %s1203 = sor.u32 256, 64
        %1204 = vbcast.lane.b32.xlu0 %v1170, %s1203
        %v1205 = vpop.permute.xlu0 %1204
        %s1207 = sor.u32 256, 72
        %1208 = vbcast.lane.b32.xlu0 %v1170, %s1207
        %v1209 = vpop.permute.xlu0 %1208
        %s1211 = sor.u32 256, 80
        %1212 = vbcast.lane.b32.xlu0 %v1170, %s1211
        %v1213 = vpop.permute.xlu0 %1212
        %s1215 = sor.u32 256, 88
        %1216 = vbcast.lane.b32.xlu0 %v1170, %s1215
        %v1217 = vpop.permute.xlu0 %1216
        %s1219 = sor.u32 256, 96
        %1220 = vbcast.lane.b32.xlu0 %v1170, %s1219
        %v1221 = vpop.permute.xlu0 %1220
        %s1223 = sor.u32 256, 104
        %1224 = vbcast.lane.b32.xlu0 %v1170, %s1223
        %v1225 = vpop.permute.xlu0 %1224
        %s1227 = sor.u32 256, 112
        %1228 = vbcast.lane.b32.xlu0 %v1170, %s1227
        %v1229 = vpop.permute.xlu0 %1228
        %s1231 = sor.u32 256, 120
        %1232 = vbcast.lane.b32.xlu0 %v1170, %s1231
        %v1233 = vpop.permute.xlu0 %1232
        %v1234 = vlaneseq
        %v1235 = vshrl.u32 %v1234, 7
        %v1236 = vsub.s32 4, %v1235
        %v1237 = vrot.slane %v695, %v1236
        %1239 = vbcast.lane.b32.xlu0 %v1237, 256
        %v1240 = vpop.permute.xlu0 %1239
        %s1242 = sor.u32 256, 8
        %1243 = vbcast.lane.b32.xlu0 %v1237, %s1242
        %v1244 = vpop.permute.xlu0 %1243
        %s1246 = sor.u32 256, 16
        %1247 = vbcast.lane.b32.xlu0 %v1237, %s1246
        %v1248 = vpop.permute.xlu0 %1247
        %s1250 = sor.u32 256, 24
        %1251 = vbcast.lane.b32.xlu0 %v1237, %s1250
        %v1252 = vpop.permute.xlu0 %1251
        %s1254 = sor.u32 256, 32
        %1255 = vbcast.lane.b32.xlu0 %v1237, %s1254
        %v1256 = vpop.permute.xlu0 %1255
        %s1258 = sor.u32 256, 40
        %1259 = vbcast.lane.b32.xlu0 %v1237, %s1258
        %v1260 = vpop.permute.xlu0 %1259
        %s1262 = sor.u32 256, 48
        %1263 = vbcast.lane.b32.xlu0 %v1237, %s1262
        %v1264 = vpop.permute.xlu0 %1263
        %s1266 = sor.u32 256, 56
        %1267 = vbcast.lane.b32.xlu0 %v1237, %s1266
        %v1268 = vpop.permute.xlu0 %1267
        %s1270 = sor.u32 256, 64
        %1271 = vbcast.lane.b32.xlu0 %v1237, %s1270
        %v1272 = vpop.permute.xlu0 %1271
        %s1274 = sor.u32 256, 72
        %1275 = vbcast.lane.b32.xlu0 %v1237, %s1274
        %v1276 = vpop.permute.xlu0 %1275
        %s1278 = sor.u32 256, 80
        %1279 = vbcast.lane.b32.xlu0 %v1237, %s1278
        %v1280 = vpop.permute.xlu0 %1279
        %s1282 = sor.u32 256, 88
        %1283 = vbcast.lane.b32.xlu0 %v1237, %s1282
        %v1284 = vpop.permute.xlu0 %1283
        %s1286 = sor.u32 256, 96
        %1287 = vbcast.lane.b32.xlu0 %v1237, %s1286
        %v1288 = vpop.permute.xlu0 %1287
        %s1290 = sor.u32 256, 104
        %1291 = vbcast.lane.b32.xlu0 %v1237, %s1290
        %v1292 = vpop.permute.xlu0 %1291
        %s1294 = sor.u32 256, 112
        %1295 = vbcast.lane.b32.xlu0 %v1237, %s1294
        %v1296 = vpop.permute.xlu0 %1295
        %s1298 = sor.u32 256, 120
        %1299 = vbcast.lane.b32.xlu0 %v1237, %s1298
        %v1300 = vpop.permute.xlu0 %1299
        %v1301 = vlaneseq
        %v1302 = vshrl.u32 %v1301, 7
        %v1303 = vsub.s32 4, %v1302
        %v1304 = vrot.slane %v696, %v1303
        %1306 = vbcast.lane.b32.xlu0 %v1304, 256
        %v1307 = vpop.permute.xlu0 %1306
        %s1309 = sor.u32 256, 8
        %1310 = vbcast.lane.b32.xlu0 %v1304, %s1309
        %v1311 = vpop.permute.xlu0 %1310
        %s1313 = sor.u32 256, 16
        %1314 = vbcast.lane.b32.xlu0 %v1304, %s1313
        %v1315 = vpop.permute.xlu0 %1314
        %s1317 = sor.u32 256, 24
        %1318 = vbcast.lane.b32.xlu0 %v1304, %s1317
        %v1319 = vpop.permute.xlu0 %1318
        %s1321 = sor.u32 256, 32
        %1322 = vbcast.lane.b32.xlu0 %v1304, %s1321
        %v1323 = vpop.permute.xlu0 %1322
        %s1325 = sor.u32 256, 40
        %1326 = vbcast.lane.b32.xlu0 %v1304, %s1325
        %v1327 = vpop.permute.xlu0 %1326
        %s1329 = sor.u32 256, 48
        %1330 = vbcast.lane.b32.xlu0 %v1304, %s1329
        %v1331 = vpop.permute.xlu0 %1330
        %s1333 = sor.u32 256, 56
        %1334 = vbcast.lane.b32.xlu0 %v1304, %s1333
        %v1335 = vpop.permute.xlu0 %1334
        %s1337 = sor.u32 256, 64
        %1338 = vbcast.lane.b32.xlu0 %v1304, %s1337
        %v1339 = vpop.permute.xlu0 %1338
        %s1341 = sor.u32 256, 72
        %1342 = vbcast.lane.b32.xlu0 %v1304, %s1341
        %v1343 = vpop.permute.xlu0 %1342
        %s1345 = sor.u32 256, 80
        %1346 = vbcast.lane.b32.xlu0 %v1304, %s1345
        %v1347 = vpop.permute.xlu0 %1346
        %s1349 = sor.u32 256, 88
        %1350 = vbcast.lane.b32.xlu0 %v1304, %s1349
        %v1351 = vpop.permute.xlu0 %1350
        %s1353 = sor.u32 256, 96
        %1354 = vbcast.lane.b32.xlu0 %v1304, %s1353
        %v1355 = vpop.permute.xlu0 %1354
        %s1357 = sor.u32 256, 104
        %1358 = vbcast.lane.b32.xlu0 %v1304, %s1357
        %v1359 = vpop.permute.xlu0 %1358
        %s1361 = sor.u32 256, 112
        %1362 = vbcast.lane.b32.xlu0 %v1304, %s1361
        %v1363 = vpop.permute.xlu0 %1362
        %s1365 = sor.u32 256, 120
        %1366 = vbcast.lane.b32.xlu0 %v1304, %s1365
        %v1367 = vpop.permute.xlu0 %1366
        %v1368 = vlaneseq
        %v1369 = vshrl.u32 %v1368, 7
        %v1370 = vsub.s32 5, %v1369
        %v1371 = vrot.slane %v695, %v1370
        %1373 = vbcast.lane.b32.xlu0 %v1371, 256
        %v1374 = vpop.permute.xlu0 %1373
        %s1376 = sor.u32 256, 8
        %1377 = vbcast.lane.b32.xlu0 %v1371, %s1376
        %v1378 = vpop.permute.xlu0 %1377
        %s1380 = sor.u32 256, 16
        %1381 = vbcast.lane.b32.xlu0 %v1371, %s1380
        %v1382 = vpop.permute.xlu0 %1381
        %s1384 = sor.u32 256, 24
        %1385 = vbcast.lane.b32.xlu0 %v1371, %s1384
        %v1386 = vpop.permute.xlu0 %1385
        %s1388 = sor.u32 256, 32
        %1389 = vbcast.lane.b32.xlu0 %v1371, %s1388
        %v1390 = vpop.permute.xlu0 %1389
        %s1392 = sor.u32 256, 40
        %1393 = vbcast.lane.b32.xlu0 %v1371, %s1392
        %v1394 = vpop.permute.xlu0 %1393
        %s1396 = sor.u32 256, 48
        %1397 = vbcast.lane.b32.xlu0 %v1371, %s1396
        %v1398 = vpop.permute.xlu0 %1397
        %s1400 = sor.u32 256, 56
        %1401 = vbcast.lane.b32.xlu0 %v1371, %s1400
        %v1402 = vpop.permute.xlu0 %1401
        %s1404 = sor.u32 256, 64
        %1405 = vbcast.lane.b32.xlu0 %v1371, %s1404
        %v1406 = vpop.permute.xlu0 %1405
        %s1408 = sor.u32 256, 72
        %1409 = vbcast.lane.b32.xlu0 %v1371, %s1408
        %v1410 = vpop.permute.xlu0 %1409
        %s1412 = sor.u32 256, 80
        %1413 = vbcast.lane.b32.xlu0 %v1371, %s1412
        %v1414 = vpop.permute.xlu0 %1413
        %s1416 = sor.u32 256, 88
        %1417 = vbcast.lane.b32.xlu0 %v1371, %s1416
        %v1418 = vpop.permute.xlu0 %1417
        %s1420 = sor.u32 256, 96
        %1421 = vbcast.lane.b32.xlu0 %v1371, %s1420
        %v1422 = vpop.permute.xlu0 %1421
        %s1424 = sor.u32 256, 104
        %1425 = vbcast.lane.b32.xlu0 %v1371, %s1424
        %v1426 = vpop.permute.xlu0 %1425
        %s1428 = sor.u32 256, 112
        %1429 = vbcast.lane.b32.xlu0 %v1371, %s1428
        %v1430 = vpop.permute.xlu0 %1429
        %s1432 = sor.u32 256, 120
        %1433 = vbcast.lane.b32.xlu0 %v1371, %s1432
        %v1434 = vpop.permute.xlu0 %1433
        %v1435 = vlaneseq
        %v1436 = vshrl.u32 %v1435, 7
        %v1437 = vsub.s32 5, %v1436
        %v1438 = vrot.slane %v696, %v1437
        %1440 = vbcast.lane.b32.xlu0 %v1438, 256
        %v1441 = vpop.permute.xlu0 %1440
        %s1443 = sor.u32 256, 8
        %1444 = vbcast.lane.b32.xlu0 %v1438, %s1443
        %v1445 = vpop.permute.xlu0 %1444
        %s1447 = sor.u32 256, 16
        %1448 = vbcast.lane.b32.xlu0 %v1438, %s1447
        %v1449 = vpop.permute.xlu0 %1448
        %s1451 = sor.u32 256, 24
        %1452 = vbcast.lane.b32.xlu0 %v1438, %s1451
        %v1453 = vpop.permute.xlu0 %1452
        %s1455 = sor.u32 256, 32
        %1456 = vbcast.lane.b32.xlu0 %v1438, %s1455
        %v1457 = vpop.permute.xlu0 %1456
        %s1459 = sor.u32 256, 40
        %1460 = vbcast.lane.b32.xlu0 %v1438, %s1459
        %v1461 = vpop.permute.xlu0 %1460
        %s1463 = sor.u32 256, 48
        %1464 = vbcast.lane.b32.xlu0 %v1438, %s1463
        %v1465 = vpop.permute.xlu0 %1464
        %s1467 = sor.u32 256, 56
        %1468 = vbcast.lane.b32.xlu0 %v1438, %s1467
        %v1469 = vpop.permute.xlu0 %1468
        %s1471 = sor.u32 256, 64
        %1472 = vbcast.lane.b32.xlu0 %v1438, %s1471
        %v1473 = vpop.permute.xlu0 %1472
        %s1475 = sor.u32 256, 72
        %1476 = vbcast.lane.b32.xlu0 %v1438, %s1475
        %v1477 = vpop.permute.xlu0 %1476
        %s1479 = sor.u32 256, 80
        %1480 = vbcast.lane.b32.xlu0 %v1438, %s1479
        %v1481 = vpop.permute.xlu0 %1480
        %s1483 = sor.u32 256, 88
        %1484 = vbcast.lane.b32.xlu0 %v1438, %s1483
        %v1485 = vpop.permute.xlu0 %1484
        %s1487 = sor.u32 256, 96
        %1488 = vbcast.lane.b32.xlu0 %v1438, %s1487
        %v1489 = vpop.permute.xlu0 %1488
        %s1491 = sor.u32 256, 104
        %1492 = vbcast.lane.b32.xlu0 %v1438, %s1491
        %v1493 = vpop.permute.xlu0 %1492
        %s1495 = sor.u32 256, 112
        %1496 = vbcast.lane.b32.xlu0 %v1438, %s1495
        %v1497 = vpop.permute.xlu0 %1496
        %s1499 = sor.u32 256, 120
        %1500 = vbcast.lane.b32.xlu0 %v1438, %s1499
        %v1501 = vpop.permute.xlu0 %1500
        %v1502 = vlaneseq
        %v1503 = vshrl.u32 %v1502, 7
        %v1504 = vsub.s32 6, %v1503
        %v1505 = vrot.slane %v695, %v1504
        %1507 = vbcast.lane.b32.xlu0 %v1505, 256
        %v1508 = vpop.permute.xlu0 %1507
        %s1510 = sor.u32 256, 8
        %1511 = vbcast.lane.b32.xlu0 %v1505, %s1510
        %v1512 = vpop.permute.xlu0 %1511
        %s1514 = sor.u32 256, 16
        %1515 = vbcast.lane.b32.xlu0 %v1505, %s1514
        %v1516 = vpop.permute.xlu0 %1515
        %s1518 = sor.u32 256, 24
        %1519 = vbcast.lane.b32.xlu0 %v1505, %s1518
        %v1520 = vpop.permute.xlu0 %1519
        %s1522 = sor.u32 256, 32
        %1523 = vbcast.lane.b32.xlu0 %v1505, %s1522
        %v1524 = vpop.permute.xlu0 %1523
        %s1526 = sor.u32 256, 40
        %1527 = vbcast.lane.b32.xlu0 %v1505, %s1526
        %v1528 = vpop.permute.xlu0 %1527
        %s1530 = sor.u32 256, 48
        %1531 = vbcast.lane.b32.xlu0 %v1505, %s1530
        %v1532 = vpop.permute.xlu0 %1531
        %s1534 = sor.u32 256, 56
        %1535 = vbcast.lane.b32.xlu0 %v1505, %s1534
        %v1536 = vpop.permute.xlu0 %1535
        %s1538 = sor.u32 256, 64
        %1539 = vbcast.lane.b32.xlu0 %v1505, %s1538
        %v1540 = vpop.permute.xlu0 %1539
        %s1542 = sor.u32 256, 72
        %1543 = vbcast.lane.b32.xlu0 %v1505, %s1542
        %v1544 = vpop.permute.xlu0 %1543
        %s1546 = sor.u32 256, 80
        %1547 = vbcast.lane.b32.xlu0 %v1505, %s1546
        %v1548 = vpop.permute.xlu0 %1547
        %s1550 = sor.u32 256, 88
        %1551 = vbcast.lane.b32.xlu0 %v1505, %s1550
        %v1552 = vpop.permute.xlu0 %1551
        %s1554 = sor.u32 256, 96
        %1555 = vbcast.lane.b32.xlu0 %v1505, %s1554
        %v1556 = vpop.permute.xlu0 %1555
        %s1558 = sor.u32 256, 104
        %1559 = vbcast.lane.b32.xlu0 %v1505, %s1558
        %v1560 = vpop.permute.xlu0 %1559
        %s1562 = sor.u32 256, 112
        %1563 = vbcast.lane.b32.xlu0 %v1505, %s1562
        %v1564 = vpop.permute.xlu0 %1563
        %s1566 = sor.u32 256, 120
        %1567 = vbcast.lane.b32.xlu0 %v1505, %s1566
        %v1568 = vpop.permute.xlu0 %1567
        %v1569 = vlaneseq
        %v1570 = vshrl.u32 %v1569, 7
        %v1571 = vsub.s32 6, %v1570
        %v1572 = vrot.slane %v696, %v1571
        %1574 = vbcast.lane.b32.xlu0 %v1572, 256
        %v1575 = vpop.permute.xlu0 %1574
        %s1577 = sor.u32 256, 8
        %1578 = vbcast.lane.b32.xlu0 %v1572, %s1577
        %v1579 = vpop.permute.xlu0 %1578
        %s1581 = sor.u32 256, 16
        %1582 = vbcast.lane.b32.xlu0 %v1572, %s1581
        %v1583 = vpop.permute.xlu0 %1582
        %s1585 = sor.u32 256, 24
        %1586 = vbcast.lane.b32.xlu0 %v1572, %s1585
        %v1587 = vpop.permute.xlu0 %1586
        %s1589 = sor.u32 256, 32
        %1590 = vbcast.lane.b32.xlu0 %v1572, %s1589
        %v1591 = vpop.permute.xlu0 %1590
        %s1593 = sor.u32 256, 40
        %1594 = vbcast.lane.b32.xlu0 %v1572, %s1593
        %v1595 = vpop.permute.xlu0 %1594
        %s1597 = sor.u32 256, 48
        %1598 = vbcast.lane.b32.xlu0 %v1572, %s1597
        %v1599 = vpop.permute.xlu0 %1598
        %s1601 = sor.u32 256, 56
        %1602 = vbcast.lane.b32.xlu0 %v1572, %s1601
        %v1603 = vpop.permute.xlu0 %1602
        %s1605 = sor.u32 256, 64
        %1606 = vbcast.lane.b32.xlu0 %v1572, %s1605
        %v1607 = vpop.permute.xlu0 %1606
        %s1609 = sor.u32 256, 72
        %1610 = vbcast.lane.b32.xlu0 %v1572, %s1609
        %v1611 = vpop.permute.xlu0 %1610
        %s1613 = sor.u32 256, 80
        %1614 = vbcast.lane.b32.xlu0 %v1572, %s1613
        %v1615 = vpop.permute.xlu0 %1614
        %s1617 = sor.u32 256, 88
        %1618 = vbcast.lane.b32.xlu0 %v1572, %s1617
        %v1619 = vpop.permute.xlu0 %1618
        %s1621 = sor.u32 256, 96
        %1622 = vbcast.lane.b32.xlu0 %v1572, %s1621
        %v1623 = vpop.permute.xlu0 %1622
        %s1625 = sor.u32 256, 104
        %1626 = vbcast.lane.b32.xlu0 %v1572, %s1625
        %v1627 = vpop.permute.xlu0 %1626
        %s1629 = sor.u32 256, 112
        %1630 = vbcast.lane.b32.xlu0 %v1572, %s1629
        %v1631 = vpop.permute.xlu0 %1630
        %s1633 = sor.u32 256, 120
        %1634 = vbcast.lane.b32.xlu0 %v1572, %s1633
        %v1635 = vpop.permute.xlu0 %1634
        %v1636 = vlaneseq
        %v1637 = vshrl.u32 %v1636, 7
        %v1638 = vsub.s32 7, %v1637
        %v1639 = vrot.slane %v695, %v1638
        %1641 = vbcast.lane.b32.xlu0 %v1639, 256
        %v1642 = vpop.permute.xlu0 %1641
        %s1644 = sor.u32 256, 8
        %1645 = vbcast.lane.b32.xlu0 %v1639, %s1644
        %v1646 = vpop.permute.xlu0 %1645
        %s1648 = sor.u32 256, 16
        %1649 = vbcast.lane.b32.xlu0 %v1639, %s1648
        %v1650 = vpop.permute.xlu0 %1649
        %s1652 = sor.u32 256, 24
        %1653 = vbcast.lane.b32.xlu0 %v1639, %s1652
        %v1654 = vpop.permute.xlu0 %1653
        %s1656 = sor.u32 256, 32
        %1657 = vbcast.lane.b32.xlu0 %v1639, %s1656
        %v1658 = vpop.permute.xlu0 %1657
        %s1660 = sor.u32 256, 40
        %1661 = vbcast.lane.b32.xlu0 %v1639, %s1660
        %v1662 = vpop.permute.xlu0 %1661
        %s1664 = sor.u32 256, 48
        %1665 = vbcast.lane.b32.xlu0 %v1639, %s1664
        %v1666 = vpop.permute.xlu0 %1665
        %s1668 = sor.u32 256, 56
        %1669 = vbcast.lane.b32.xlu0 %v1639, %s1668
        %v1670 = vpop.permute.xlu0 %1669
        %s1672 = sor.u32 256, 64
        %1673 = vbcast.lane.b32.xlu0 %v1639, %s1672
        %v1674 = vpop.permute.xlu0 %1673
        %s1676 = sor.u32 256, 72
        %1677 = vbcast.lane.b32.xlu0 %v1639, %s1676
        %v1678 = vpop.permute.xlu0 %1677
        %s1680 = sor.u32 256, 80
        %1681 = vbcast.lane.b32.xlu0 %v1639, %s1680
        %v1682 = vpop.permute.xlu0 %1681
        %s1684 = sor.u32 256, 88
        %1685 = vbcast.lane.b32.xlu0 %v1639, %s1684
        %v1686 = vpop.permute.xlu0 %1685
        %s1688 = sor.u32 256, 96
        %1689 = vbcast.lane.b32.xlu0 %v1639, %s1688
        %v1690 = vpop.permute.xlu0 %1689
        %s1692 = sor.u32 256, 104
        %1693 = vbcast.lane.b32.xlu0 %v1639, %s1692
        %v1694 = vpop.permute.xlu0 %1693
        %s1696 = sor.u32 256, 112
        %1697 = vbcast.lane.b32.xlu0 %v1639, %s1696
        %v1698 = vpop.permute.xlu0 %1697
        %s1700 = sor.u32 256, 120
        %1701 = vbcast.lane.b32.xlu0 %v1639, %s1700
        %v1702 = vpop.permute.xlu0 %1701
        %v1703 = vlaneseq
        %v1704 = vshrl.u32 %v1703, 7
        %v1705 = vsub.s32 7, %v1704
        %v1706 = vrot.slane %v696, %v1705
        %1708 = vbcast.lane.b32.xlu0 %v1706, 256
        %v1709 = vpop.permute.xlu0 %1708
        %s1711 = sor.u32 256, 8
        %1712 = vbcast.lane.b32.xlu0 %v1706, %s1711
        %v1713 = vpop.permute.xlu0 %1712
        %s1715 = sor.u32 256, 16
        %1716 = vbcast.lane.b32.xlu0 %v1706, %s1715
        %v1717 = vpop.permute.xlu0 %1716
        %s1719 = sor.u32 256, 24
        %1720 = vbcast.lane.b32.xlu0 %v1706, %s1719
        %v1721 = vpop.permute.xlu0 %1720
        %s1723 = sor.u32 256, 32
        %1724 = vbcast.lane.b32.xlu0 %v1706, %s1723
        %v1725 = vpop.permute.xlu0 %1724
        %s1727 = sor.u32 256, 40
        %1728 = vbcast.lane.b32.xlu0 %v1706, %s1727
        %v1729 = vpop.permute.xlu0 %1728
        %s1731 = sor.u32 256, 48
        %1732 = vbcast.lane.b32.xlu0 %v1706, %s1731
        %v1733 = vpop.permute.xlu0 %1732
        %s1735 = sor.u32 256, 56
        %1736 = vbcast.lane.b32.xlu0 %v1706, %s1735
        %v1737 = vpop.permute.xlu0 %1736
        %s1739 = sor.u32 256, 64
        %1740 = vbcast.lane.b32.xlu0 %v1706, %s1739
        %v1741 = vpop.permute.xlu0 %1740
        %s1743 = sor.u32 256, 72
        %1744 = vbcast.lane.b32.xlu0 %v1706, %s1743
        %v1745 = vpop.permute.xlu0 %1744
        %s1747 = sor.u32 256, 80
        %1748 = vbcast.lane.b32.xlu0 %v1706, %s1747
        %v1749 = vpop.permute.xlu0 %1748
        %s1751 = sor.u32 256, 88
        %1752 = vbcast.lane.b32.xlu0 %v1706, %s1751
        %v1753 = vpop.permute.xlu0 %1752
        %s1755 = sor.u32 256, 96
        %1756 = vbcast.lane.b32.xlu0 %v1706, %s1755
        %v1757 = vpop.permute.xlu0 %1756
        %s1759 = sor.u32 256, 104
        %1760 = vbcast.lane.b32.xlu0 %v1706, %s1759
        %v1761 = vpop.permute.xlu0 %1760
        %s1763 = sor.u32 256, 112
        %1764 = vbcast.lane.b32.xlu0 %v1706, %s1763
        %v1765 = vpop.permute.xlu0 %1764
        %s1767 = sor.u32 256, 120
        %1768 = vbcast.lane.b32.xlu0 %v1706, %s1767
        %v1769 = vpop.permute.xlu0 %1768
        %v1770 = vunpack.c.l.bf16 %v439
        %v1771 = vunpack.c.l.bf16 %v440
        %v1772 = vunpack.c.l.bf16 %v441
        %v1773 = vunpack.c.l.bf16 %v442
        %v1774 = vunpack.c.l.bf16 %v443
        %v1775 = vunpack.c.l.bf16 %v444
        %v1776 = vunpack.c.l.bf16 %v445
        %v1777 = vunpack.c.l.bf16 %v446
        %v1778 = vunpack.c.l.bf16 %v447
        %v1779 = vunpack.c.l.bf16 %v448
        %v1780 = vunpack.c.l.bf16 %v449
        %v1781 = vunpack.c.l.bf16 %v450
        %v1782 = vunpack.c.l.bf16 %v451
        %v1783 = vunpack.c.l.bf16 %v452
        %v1784 = vunpack.c.l.bf16 %v453
        %v1785 = vunpack.c.l.bf16 %v454
        %v1786 = vunpack.c.l.bf16 %v455
        %v1787 = vunpack.c.l.bf16 %v456
        %v1788 = vunpack.c.l.bf16 %v457
        %v1789 = vunpack.c.l.bf16 %v458
        %v1790 = vunpack.c.l.bf16 %v459
        %v1791 = vunpack.c.l.bf16 %v460
        %v1792 = vunpack.c.l.bf16 %v461
        %v1793 = vunpack.c.l.bf16 %v462
        %v1794 = vunpack.c.l.bf16 %v463
        %v1795 = vunpack.c.l.bf16 %v464
        %v1796 = vunpack.c.l.bf16 %v465
        %v1797 = vunpack.c.l.bf16 %v466
        %v1798 = vunpack.c.l.bf16 %v467
        %v1799 = vunpack.c.l.bf16 %v468
        %v1800 = vunpack.c.l.bf16 %v469
        %v1801 = vunpack.c.l.bf16 %v470
        %v1802 = vunpack.c.l.bf16 %v471
        %v1803 = vunpack.c.l.bf16 %v472
        %v1804 = vunpack.c.l.bf16 %v473
        %v1805 = vunpack.c.l.bf16 %v474
        %v1806 = vunpack.c.l.bf16 %v475
        %v1807 = vunpack.c.l.bf16 %v476
        %v1808 = vunpack.c.l.bf16 %v477
        %v1809 = vunpack.c.l.bf16 %v478
        %v1810 = vunpack.c.l.bf16 %v479
        %v1811 = vunpack.c.l.bf16 %v480
        %v1812 = vunpack.c.l.bf16 %v481
        %v1813 = vunpack.c.l.bf16 %v482
        %v1814 = vunpack.c.l.bf16 %v483
        %v1815 = vunpack.c.l.bf16 %v484
        %v1816 = vunpack.c.l.bf16 %v485
        %v1817 = vunpack.c.l.bf16 %v486
        %v1818 = vunpack.c.l.bf16 %v487
        %v1819 = vunpack.c.l.bf16 %v488
        %v1820 = vunpack.c.l.bf16 %v489
        %v1821 = vunpack.c.l.bf16 %v490
        %v1822 = vunpack.c.l.bf16 %v491
        %v1823 = vunpack.c.l.bf16 %v492
        %v1824 = vunpack.c.l.bf16 %v493
        %v1825 = vunpack.c.l.bf16 %v494
        %v1826 = vunpack.c.l.bf16 %v495
        %v1827 = vunpack.c.l.bf16 %v496
        %v1828 = vunpack.c.l.bf16 %v497
        %v1829 = vunpack.c.l.bf16 %v498
        %v1830 = vunpack.c.l.bf16 %v499
        %v1831 = vunpack.c.l.bf16 %v500
        %v1832 = vunpack.c.l.bf16 %v501
        %v1833 = vunpack.c.l.bf16 %v502
        %v1834 = vunpack.c.l.bf16 %v503
        %v1835 = vunpack.c.l.bf16 %v504
        %v1836 = vunpack.c.l.bf16 %v505
        %v1837 = vunpack.c.l.bf16 %v506
        %v1838 = vunpack.c.l.bf16 %v507
        %v1839 = vunpack.c.l.bf16 %v508
        %v1840 = vunpack.c.l.bf16 %v509
        %v1841 = vunpack.c.l.bf16 %v510
        %v1842 = vunpack.c.l.bf16 %v511
        %v1843 = vunpack.c.l.bf16 %v512
        %v1844 = vunpack.c.l.bf16 %v513
        %v1845 = vunpack.c.l.bf16 %v514
        %v1846 = vunpack.c.l.bf16 %v515
        %v1847 = vunpack.c.l.bf16 %v516
        %v1848 = vunpack.c.l.bf16 %v517
        %v1849 = vunpack.c.l.bf16 %v518
        %v1850 = vunpack.c.l.bf16 %v519
        %v1851 = vunpack.c.l.bf16 %v520
        %v1852 = vunpack.c.l.bf16 %v521
        %v1853 = vunpack.c.l.bf16 %v522
        %v1854 = vunpack.c.l.bf16 %v523
        %v1855 = vunpack.c.l.bf16 %v524
        %v1856 = vunpack.c.l.bf16 %v525
        %v1857 = vunpack.c.l.bf16 %v526
        %v1858 = vunpack.c.l.bf16 %v527
        %v1859 = vunpack.c.l.bf16 %v528
        %v1860 = vunpack.c.l.bf16 %v529
        %v1861 = vunpack.c.l.bf16 %v530
        %v1862 = vunpack.c.l.bf16 %v531
        %v1863 = vunpack.c.l.bf16 %v532
        %v1864 = vunpack.c.l.bf16 %v533
        %v1865 = vunpack.c.l.bf16 %v534
        %v1866 = vunpack.c.l.bf16 %v535
        %v1867 = vunpack.c.l.bf16 %v536
        %v1868 = vunpack.c.l.bf16 %v537
        %v1869 = vunpack.c.l.bf16 %v538
        %v1870 = vunpack.c.l.bf16 %v539
        %v1871 = vunpack.c.l.bf16 %v540
        %v1872 = vunpack.c.l.bf16 %v541
        %v1873 = vunpack.c.l.bf16 %v542
        %v1874 = vunpack.c.l.bf16 %v543
        %v1875 = vunpack.c.l.bf16 %v544
        %v1876 = vunpack.c.l.bf16 %v545
        %v1877 = vunpack.c.l.bf16 %v546
        %v1878 = vunpack.c.l.bf16 %v547
        %v1879 = vunpack.c.l.bf16 %v548
        %v1880 = vunpack.c.l.bf16 %v549
        %v1881 = vunpack.c.l.bf16 %v550
        %v1882 = vunpack.c.l.bf16 %v551
        %v1883 = vunpack.c.l.bf16 %v552
        %v1884 = vunpack.c.l.bf16 %v553
        %v1885 = vunpack.c.l.bf16 %v554
        %v1886 = vunpack.c.l.bf16 %v555
        %v1887 = vunpack.c.l.bf16 %v556
        %v1888 = vunpack.c.l.bf16 %v557
        %v1889 = vunpack.c.l.bf16 %v558
        %v1890 = vunpack.c.l.bf16 %v559
        %v1891 = vunpack.c.l.bf16 %v560
        %v1892 = vunpack.c.l.bf16 %v561
        %v1893 = vunpack.c.l.bf16 %v562
        %v1894 = vunpack.c.l.bf16 %v563
        %v1895 = vunpack.c.l.bf16 %v564
        %v1896 = vunpack.c.l.bf16 %v565
        %v1897 = vunpack.c.l.bf16 %v566
        %v1898 = vunpack.c.l.bf16 %v567
        %v1899 = vunpack.c.l.bf16 %v568
        %v1900 = vunpack.c.l.bf16 %v569
        %v1901 = vunpack.c.l.bf16 %v570
        %v1902 = vunpack.c.l.bf16 %v571
        %v1903 = vunpack.c.l.bf16 %v572
        %v1904 = vunpack.c.l.bf16 %v573
        %v1905 = vunpack.c.l.bf16 %v574
        %v1906 = vunpack.c.l.bf16 %v575
        %v1907 = vunpack.c.l.bf16 %v576
        %v1908 = vunpack.c.l.bf16 %v577
        %v1909 = vunpack.c.l.bf16 %v578
        %v1910 = vunpack.c.l.bf16 %v579
        %v1911 = vunpack.c.l.bf16 %v580
        %v1912 = vunpack.c.l.bf16 %v581
        %v1913 = vunpack.c.l.bf16 %v582
        %v1914 = vunpack.c.l.bf16 %v583
        %v1915 = vunpack.c.l.bf16 %v584
        %v1916 = vunpack.c.l.bf16 %v585
        %v1917 = vunpack.c.l.bf16 %v586
        %v1918 = vunpack.c.l.bf16 %v587
        %v1919 = vunpack.c.l.bf16 %v588
        %v1920 = vunpack.c.l.bf16 %v589
        %v1921 = vunpack.c.l.bf16 %v590
        %v1922 = vunpack.c.l.bf16 %v591
        %v1923 = vunpack.c.l.bf16 %v592
        %v1924 = vunpack.c.l.bf16 %v593
        %v1925 = vunpack.c.l.bf16 %v594
        %v1926 = vunpack.c.l.bf16 %v595
        %v1927 = vunpack.c.l.bf16 %v596
        %v1928 = vunpack.c.l.bf16 %v597
        %v1929 = vunpack.c.l.bf16 %v598
        %v1930 = vunpack.c.l.bf16 %v599
        %v1931 = vunpack.c.l.bf16 %v600
        %v1932 = vunpack.c.l.bf16 %v601
        %v1933 = vunpack.c.l.bf16 %v602
        %v1934 = vunpack.c.l.bf16 %v603
        %v1935 = vunpack.c.l.bf16 %v604
        %v1936 = vunpack.c.l.bf16 %v605
        %v1937 = vunpack.c.l.bf16 %v606
        %v1938 = vunpack.c.l.bf16 %v607
        %v1939 = vunpack.c.l.bf16 %v608
        %v1940 = vunpack.c.l.bf16 %v609
        %v1941 = vunpack.c.l.bf16 %v610
        %v1942 = vunpack.c.l.bf16 %v611
        %v1943 = vunpack.c.l.bf16 %v612
        %v1944 = vunpack.c.l.bf16 %v613
        %v1945 = vunpack.c.l.bf16 %v614
        %v1946 = vunpack.c.l.bf16 %v615
        %v1947 = vunpack.c.l.bf16 %v616
        %v1948 = vunpack.c.l.bf16 %v617
        %v1949 = vunpack.c.l.bf16 %v618
        %v1950 = vunpack.c.l.bf16 %v619
        %v1951 = vunpack.c.l.bf16 %v620
        %v1952 = vunpack.c.l.bf16 %v621
        %v1953 = vunpack.c.l.bf16 %v622
        %v1954 = vunpack.c.l.bf16 %v623
        %v1955 = vunpack.c.l.bf16 %v624
        %v1956 = vunpack.c.l.bf16 %v625
        %v1957 = vunpack.c.l.bf16 %v626
        %v1958 = vunpack.c.l.bf16 %v627
        %v1959 = vunpack.c.l.bf16 %v628
        %v1960 = vunpack.c.l.bf16 %v629
        %v1961 = vunpack.c.l.bf16 %v630
        %v1962 = vunpack.c.l.bf16 %v631
        %v1963 = vunpack.c.l.bf16 %v632
        %v1964 = vunpack.c.l.bf16 %v633
        %v1965 = vunpack.c.l.bf16 %v634
        %v1966 = vunpack.c.l.bf16 %v635
        %v1967 = vunpack.c.l.bf16 %v636
        %v1968 = vunpack.c.l.bf16 %v637
        %v1969 = vunpack.c.l.bf16 %v638
        %v1970 = vunpack.c.l.bf16 %v639
        %v1971 = vunpack.c.l.bf16 %v640
        %v1972 = vunpack.c.l.bf16 %v641
        %v1973 = vunpack.c.l.bf16 %v642
        %v1974 = vunpack.c.l.bf16 %v643
        %v1975 = vunpack.c.l.bf16 %v644
        %v1976 = vunpack.c.l.bf16 %v645
        %v1977 = vunpack.c.l.bf16 %v646
        %v1978 = vunpack.c.l.bf16 %v647
        %v1979 = vunpack.c.l.bf16 %v648
        %v1980 = vunpack.c.l.bf16 %v649
        %v1981 = vunpack.c.l.bf16 %v650
        %v1982 = vunpack.c.l.bf16 %v651
        %v1983 = vunpack.c.l.bf16 %v652
        %v1984 = vunpack.c.l.bf16 %v653
        %v1985 = vunpack.c.l.bf16 %v654
        %v1986 = vunpack.c.l.bf16 %v655
        %v1987 = vunpack.c.l.bf16 %v656
        %v1988 = vunpack.c.l.bf16 %v657
        %v1989 = vunpack.c.l.bf16 %v658
        %v1990 = vunpack.c.l.bf16 %v659
        %v1991 = vunpack.c.l.bf16 %v660
        %v1992 = vunpack.c.l.bf16 %v661
        %v1993 = vunpack.c.l.bf16 %v662
        %v1994 = vunpack.c.l.bf16 %v663
        %v1995 = vunpack.c.l.bf16 %v664
        %v1996 = vunpack.c.l.bf16 %v665
        %v1997 = vunpack.c.l.bf16 %v666
        %v1998 = vunpack.c.l.bf16 %v667
        %v1999 = vunpack.c.l.bf16 %v668
        %v2000 = vunpack.c.l.bf16 %v669
        %v2001 = vunpack.c.l.bf16 %v670
        %v2002 = vunpack.c.l.bf16 %v671
        %v2003 = vunpack.c.l.bf16 %v672
        %v2004 = vunpack.c.l.bf16 %v673
        %v2005 = vunpack.c.l.bf16 %v674
        %v2006 = vunpack.c.l.bf16 %v675
        %v2007 = vunpack.c.l.bf16 %v676
        %v2008 = vunpack.c.l.bf16 %v677
        %v2009 = vunpack.c.l.bf16 %v678
        %v2010 = vunpack.c.l.bf16 %v679
        %v2011 = vunpack.c.l.bf16 %v680
        %v2012 = vunpack.c.l.bf16 %v681
        %v2013 = vunpack.c.l.bf16 %v682
        %v2014 = vunpack.c.l.bf16 %v683
        %v2015 = vunpack.c.l.bf16 %v684
        %v2016 = vunpack.c.l.bf16 %v685
        %v2017 = vunpack.c.l.bf16 %v686
        %v2018 = vunpack.c.l.bf16 %v687
        %v2019 = vunpack.c.l.bf16 %v688
        %v2020 = vunpack.c.l.bf16 %v689
        %v2021 = vunpack.c.l.bf16 %v690
        %v2022 = vunpack.c.l.bf16 %v691
        %v2023 = vunpack.c.l.bf16 %v692
        %v2024 = vunpack.c.l.bf16 %v693
        %v2025 = vunpack.c.l.bf16 %v694
        %v2026 = vmul.f32 %v1770, %v704
        %v2027 = vmul.f32 %v1771, %v708
        %v2028 = vmul.f32 %v1772, %v712
        %v2029 = vmul.f32 %v1773, %v716
        %v2030 = vmul.f32 %v1774, %v720
        %v2031 = vmul.f32 %v1775, %v724
        %v2032 = vmul.f32 %v1776, %v728
        %v2033 = vmul.f32 %v1777, %v732
        %v2034 = vmul.f32 %v1778, %v736
        %v2035 = vmul.f32 %v1779, %v740
        %v2036 = vmul.f32 %v1780, %v744
        %v2037 = vmul.f32 %v1781, %v748
        %v2038 = vmul.f32 %v1782, %v752
        %v2039 = vmul.f32 %v1783, %v756
        %v2040 = vmul.f32 %v1784, %v760
        %v2041 = vmul.f32 %v1785, %v764
        %v2042 = vmul.f32 %v1786, %v771
        %v2043 = vmul.f32 %v1787, %v775
        %v2044 = vmul.f32 %v1788, %v779
        %v2045 = vmul.f32 %v1789, %v783
        %v2046 = vmul.f32 %v1790, %v787
        %v2047 = vmul.f32 %v1791, %v791
        %v2048 = vmul.f32 %v1792, %v795
        %v2049 = vmul.f32 %v1793, %v799
        %v2050 = vmul.f32 %v1794, %v803
        %v2051 = vmul.f32 %v1795, %v807
        %v2052 = vmul.f32 %v1796, %v811
        %v2053 = vmul.f32 %v1797, %v815
        %v2054 = vmul.f32 %v1798, %v819
        %v2055 = vmul.f32 %v1799, %v823
        %v2056 = vmul.f32 %v1800, %v827
        %v2057 = vmul.f32 %v1801, %v831
        %v2058 = vmul.f32 %v1802, %v838
        %v2059 = vmul.f32 %v1803, %v842
        %v2060 = vmul.f32 %v1804, %v846
        %v2061 = vmul.f32 %v1805, %v850
        %v2062 = vmul.f32 %v1806, %v854
        %v2063 = vmul.f32 %v1807, %v858
        %v2064 = vmul.f32 %v1808, %v862
        %v2065 = vmul.f32 %v1809, %v866
        %v2066 = vmul.f32 %v1810, %v870
        %v2067 = vmul.f32 %v1811, %v874
        %v2068 = vmul.f32 %v1812, %v878
        %v2069 = vmul.f32 %v1813, %v882
        %v2070 = vmul.f32 %v1814, %v886
        %v2071 = vmul.f32 %v1815, %v890
        %v2072 = vmul.f32 %v1816, %v894
        %v2073 = vmul.f32 %v1817, %v898
        %v2074 = vmul.f32 %v1818, %v905
        %v2075 = vmul.f32 %v1819, %v909
        %v2076 = vmul.f32 %v1820, %v913
        %v2077 = vmul.f32 %v1821, %v917
        %v2078 = vmul.f32 %v1822, %v921
        %v2079 = vmul.f32 %v1823, %v925
        %v2080 = vmul.f32 %v1824, %v929
        %v2081 = vmul.f32 %v1825, %v933
        %v2082 = vmul.f32 %v1826, %v937
        %v2083 = vmul.f32 %v1827, %v941
        %v2084 = vmul.f32 %v1828, %v945
        %v2085 = vmul.f32 %v1829, %v949
        %v2086 = vmul.f32 %v1830, %v953
        %v2087 = vmul.f32 %v1831, %v957
        %v2088 = vmul.f32 %v1832, %v961
        %v2089 = vmul.f32 %v1833, %v965
        %v2090 = vmul.f32 %v1834, %v972
        %v2091 = vmul.f32 %v1835, %v976
        %v2092 = vmul.f32 %v1836, %v980
        %v2093 = vmul.f32 %v1837, %v984
        %v2094 = vmul.f32 %v1838, %v988
        %v2095 = vmul.f32 %v1839, %v992
        %v2096 = vmul.f32 %v1840, %v996
        %v2097 = vmul.f32 %v1841, %v1000
        %v2098 = vmul.f32 %v1842, %v1004
        %v2099 = vmul.f32 %v1843, %v1008
        %v2100 = vmul.f32 %v1844, %v1012
        %v2101 = vmul.f32 %v1845, %v1016
        %v2102 = vmul.f32 %v1846, %v1020
        %v2103 = vmul.f32 %v1847, %v1024
        %v2104 = vmul.f32 %v1848, %v1028
        %v2105 = vmul.f32 %v1849, %v1032
        %v2106 = vmul.f32 %v1850, %v1039
        %v2107 = vmul.f32 %v1851, %v1043
        %v2108 = vmul.f32 %v1852, %v1047
        %v2109 = vmul.f32 %v1853, %v1051
        %v2110 = vmul.f32 %v1854, %v1055
        %v2111 = vmul.f32 %v1855, %v1059
        %v2112 = vmul.f32 %v1856, %v1063
        %v2113 = vmul.f32 %v1857, %v1067
        %v2114 = vmul.f32 %v1858, %v1071
        %v2115 = vmul.f32 %v1859, %v1075
        %v2116 = vmul.f32 %v1860, %v1079
        %v2117 = vmul.f32 %v1861, %v1083
        %v2118 = vmul.f32 %v1862, %v1087
        %v2119 = vmul.f32 %v1863, %v1091
        %v2120 = vmul.f32 %v1864, %v1095
        %v2121 = vmul.f32 %v1865, %v1099
        %v2122 = vmul.f32 %v1866, %v1106
        %v2123 = vmul.f32 %v1867, %v1110
        %v2124 = vmul.f32 %v1868, %v1114
        %v2125 = vmul.f32 %v1869, %v1118
        %v2126 = vmul.f32 %v1870, %v1122
        %v2127 = vmul.f32 %v1871, %v1126
        %v2128 = vmul.f32 %v1872, %v1130
        %v2129 = vmul.f32 %v1873, %v1134
        %v2130 = vmul.f32 %v1874, %v1138
        %v2131 = vmul.f32 %v1875, %v1142
        %v2132 = vmul.f32 %v1876, %v1146
        %v2133 = vmul.f32 %v1877, %v1150
        %v2134 = vmul.f32 %v1878, %v1154
        %v2135 = vmul.f32 %v1879, %v1158
        %v2136 = vmul.f32 %v1880, %v1162
        %v2137 = vmul.f32 %v1881, %v1166
        %v2138 = vmul.f32 %v1882, %v1173
        %v2139 = vmul.f32 %v1883, %v1177
        %v2140 = vmul.f32 %v1884, %v1181
        %v2141 = vmul.f32 %v1885, %v1185
        %v2142 = vmul.f32 %v1886, %v1189
        %v2143 = vmul.f32 %v1887, %v1193
        %v2144 = vmul.f32 %v1888, %v1197
        %v2145 = vmul.f32 %v1889, %v1201
        %v2146 = vmul.f32 %v1890, %v1205
        %v2147 = vmul.f32 %v1891, %v1209
        %v2148 = vmul.f32 %v1892, %v1213
        %v2149 = vmul.f32 %v1893, %v1217
        %v2150 = vmul.f32 %v1894, %v1221
        %v2151 = vmul.f32 %v1895, %v1225
        %v2152 = vmul.f32 %v1896, %v1229
        %v2153 = vmul.f32 %v1897, %v1233
        %v2154 = vmul.f32 %v1898, %v1240
        %v2155 = vmul.f32 %v1899, %v1244
        %v2156 = vmul.f32 %v1900, %v1248
        %v2157 = vmul.f32 %v1901, %v1252
        %v2158 = vmul.f32 %v1902, %v1256
        %v2159 = vmul.f32 %v1903, %v1260
        %v2160 = vmul.f32 %v1904, %v1264
        %v2161 = vmul.f32 %v1905, %v1268
        %v2162 = vmul.f32 %v1906, %v1272
        %v2163 = vmul.f32 %v1907, %v1276
        %v2164 = vmul.f32 %v1908, %v1280
        %v2165 = vmul.f32 %v1909, %v1284
        %v2166 = vmul.f32 %v1910, %v1288
        %v2167 = vmul.f32 %v1911, %v1292
        %v2168 = vmul.f32 %v1912, %v1296
        %v2169 = vmul.f32 %v1913, %v1300
        %v2170 = vmul.f32 %v1914, %v1307
        %v2171 = vmul.f32 %v1915, %v1311
        %v2172 = vmul.f32 %v1916, %v1315
        %v2173 = vmul.f32 %v1917, %v1319
        %v2174 = vmul.f32 %v1918, %v1323
        %v2175 = vmul.f32 %v1919, %v1327
        %v2176 = vmul.f32 %v1920, %v1331
        %v2177 = vmul.f32 %v1921, %v1335
        %v2178 = vmul.f32 %v1922, %v1339
        %v2179 = vmul.f32 %v1923, %v1343
        %v2180 = vmul.f32 %v1924, %v1347
        %v2181 = vmul.f32 %v1925, %v1351
        %v2182 = vmul.f32 %v1926, %v1355
        %v2183 = vmul.f32 %v1927, %v1359
        %v2184 = vmul.f32 %v1928, %v1363
        %v2185 = vmul.f32 %v1929, %v1367
        %v2186 = vmul.f32 %v1930, %v1374
        %v2187 = vmul.f32 %v1931, %v1378
        %v2188 = vmul.f32 %v1932, %v1382
        %v2189 = vmul.f32 %v1933, %v1386
        %v2190 = vmul.f32 %v1934, %v1390
        %v2191 = vmul.f32 %v1935, %v1394
        %v2192 = vmul.f32 %v1936, %v1398
        %v2193 = vmul.f32 %v1937, %v1402
        %v2194 = vmul.f32 %v1938, %v1406
        %v2195 = vmul.f32 %v1939, %v1410
        %v2196 = vmul.f32 %v1940, %v1414
        %v2197 = vmul.f32 %v1941, %v1418
        %v2198 = vmul.f32 %v1942, %v1422
        %v2199 = vmul.f32 %v1943, %v1426
        %v2200 = vmul.f32 %v1944, %v1430
        %v2201 = vmul.f32 %v1945, %v1434
        %v2202 = vmul.f32 %v1946, %v1441
        %v2203 = vmul.f32 %v1947, %v1445
        %v2204 = vmul.f32 %v1948, %v1449
        %v2205 = vmul.f32 %v1949, %v1453
        %v2206 = vmul.f32 %v1950, %v1457
        %v2207 = vmul.f32 %v1951, %v1461
        %v2208 = vmul.f32 %v1952, %v1465
        %v2209 = vmul.f32 %v1953, %v1469
        %v2210 = vmul.f32 %v1954, %v1473
        %v2211 = vmul.f32 %v1955, %v1477
        %v2212 = vmul.f32 %v1956, %v1481
        %v2213 = vmul.f32 %v1957, %v1485
        %v2214 = vmul.f32 %v1958, %v1489
        %v2215 = vmul.f32 %v1959, %v1493
        %v2216 = vmul.f32 %v1960, %v1497
        %v2217 = vmul.f32 %v1961, %v1501
        %v2218 = vmul.f32 %v1962, %v1508
        %v2219 = vmul.f32 %v1963, %v1512
        %v2220 = vmul.f32 %v1964, %v1516
        %v2221 = vmul.f32 %v1965, %v1520
        %v2222 = vmul.f32 %v1966, %v1524
        %v2223 = vmul.f32 %v1967, %v1528
        %v2224 = vmul.f32 %v1968, %v1532
        %v2225 = vmul.f32 %v1969, %v1536
        %v2226 = vmul.f32 %v1970, %v1540
        %v2227 = vmul.f32 %v1971, %v1544
        %v2228 = vmul.f32 %v1972, %v1548
        %v2229 = vmul.f32 %v1973, %v1552
        %v2230 = vmul.f32 %v1974, %v1556
        %v2231 = vmul.f32 %v1975, %v1560
        %v2232 = vmul.f32 %v1976, %v1564
        %v2233 = vmul.f32 %v1977, %v1568
        %v2234 = vmul.f32 %v1978, %v1575
        %v2235 = vmul.f32 %v1979, %v1579
        %v2236 = vmul.f32 %v1980, %v1583
        %v2237 = vmul.f32 %v1981, %v1587
        %v2238 = vmul.f32 %v1982, %v1591
        %v2239 = vmul.f32 %v1983, %v1595
        %v2240 = vmul.f32 %v1984, %v1599
        %v2241 = vmul.f32 %v1985, %v1603
        %v2242 = vmul.f32 %v1986, %v1607
        %v2243 = vmul.f32 %v1987, %v1611
        %v2244 = vmul.f32 %v1988, %v1615
        %v2245 = vmul.f32 %v1989, %v1619
        %v2246 = vmul.f32 %v1990, %v1623
        %v2247 = vmul.f32 %v1991, %v1627
        %v2248 = vmul.f32 %v1992, %v1631
        %v2249 = vmul.f32 %v1993, %v1635
        %v2250 = vmul.f32 %v1994, %v1642
        %v2251 = vmul.f32 %v1995, %v1646
        %v2252 = vmul.f32 %v1996, %v1650
        %v2253 = vmul.f32 %v1997, %v1654
        %v2254 = vmul.f32 %v1998, %v1658
        %v2255 = vmul.f32 %v1999, %v1662
        %v2256 = vmul.f32 %v2000, %v1666
        %v2257 = vmul.f32 %v2001, %v1670
        %v2258 = vmul.f32 %v2002, %v1674
        %v2259 = vmul.f32 %v2003, %v1678
        %v2260 = vmul.f32 %v2004, %v1682
        %v2261 = vmul.f32 %v2005, %v1686
        %v2262 = vmul.f32 %v2006, %v1690
        %v2263 = vmul.f32 %v2007, %v1694
        %v2264 = vmul.f32 %v2008, %v1698
        %v2265 = vmul.f32 %v2009, %v1702
        %v2266 = vmul.f32 %v2010, %v1709
        %v2267 = vmul.f32 %v2011, %v1713
        %v2268 = vmul.f32 %v2012, %v1717
        %v2269 = vmul.f32 %v2013, %v1721
        %v2270 = vmul.f32 %v2014, %v1725
        %v2271 = vmul.f32 %v2015, %v1729
        %v2272 = vmul.f32 %v2016, %v1733
        %v2273 = vmul.f32 %v2017, %v1737
        %v2274 = vmul.f32 %v2018, %v1741
        %v2275 = vmul.f32 %v2019, %v1745
        %v2276 = vmul.f32 %v2020, %v1749
        %v2277 = vmul.f32 %v2021, %v1753
        %v2278 = vmul.f32 %v2022, %v1757
        %v2279 = vmul.f32 %v2023, %v1761
        %v2280 = vmul.f32 %v2024, %v1765
        %v2281 = vmul.f32 %v2025, %v1769
        %v2282 = vadd.f32 %v2026, %v2027
        %v2283 = vadd.f32 %v2282, %v2028
        %v2284 = vadd.f32 %v2283, %v2029
        %v2285 = vadd.f32 %v2284, %v2030
        %v2286 = vadd.f32 %v2285, %v2031
        %v2287 = vadd.f32 %v2286, %v2032
        %v2288 = vadd.f32 %v2287, %v2033
        %v2289 = vadd.f32 %v2288, %v2034
        %v2290 = vadd.f32 %v2289, %v2035
        %v2291 = vadd.f32 %v2290, %v2036
        %v2292 = vadd.f32 %v2291, %v2037
        %v2293 = vadd.f32 %v2292, %v2038
        %v2294 = vadd.f32 %v2293, %v2039
        %v2295 = vadd.f32 %v2294, %v2040
        %v2296 = vadd.f32 %v2295, %v2041
        %v2297 = vadd.f32 %v2296, %v2042
        %v2298 = vadd.f32 %v2297, %v2043
        %v2299 = vadd.f32 %v2298, %v2044
        %v2300 = vadd.f32 %v2299, %v2045
        %v2301 = vadd.f32 %v2300, %v2046
        %v2302 = vadd.f32 %v2301, %v2047
        %v2303 = vadd.f32 %v2302, %v2048
        %v2304 = vadd.f32 %v2303, %v2049
        %v2305 = vadd.f32 %v2304, %v2050
        %v2306 = vadd.f32 %v2305, %v2051
        %v2307 = vadd.f32 %v2306, %v2052
        %v2308 = vadd.f32 %v2307, %v2053
        %v2309 = vadd.f32 %v2308, %v2054
        %v2310 = vadd.f32 %v2309, %v2055
        %v2311 = vadd.f32 %v2310, %v2056
        %v2312 = vadd.f32 %v2311, %v2057
        %v2313 = vrot.slane %v2312, 4
        %v2314 = vadd.f32 %v2312, %v2313
        %v2315 = vrot.slane %v2314, 2
        %v2316 = vadd.f32 %v2314, %v2315
        %v2317 = vrot.slane %v2316, 1
        %v2318 = vadd.f32 %v2316, %v2317
        %v2319 = vadd.f32 %v2058, %v2059
        %v2320 = vadd.f32 %v2319, %v2060
        %v2321 = vadd.f32 %v2320, %v2061
        %v2322 = vadd.f32 %v2321, %v2062
        %v2323 = vadd.f32 %v2322, %v2063
        %v2324 = vadd.f32 %v2323, %v2064
        %v2325 = vadd.f32 %v2324, %v2065
        %v2326 = vadd.f32 %v2325, %v2066
        %v2327 = vadd.f32 %v2326, %v2067
        %v2328 = vadd.f32 %v2327, %v2068
        %v2329 = vadd.f32 %v2328, %v2069
        %v2330 = vadd.f32 %v2329, %v2070
        %v2331 = vadd.f32 %v2330, %v2071
        %v2332 = vadd.f32 %v2331, %v2072
        %v2333 = vadd.f32 %v2332, %v2073
        %v2334 = vadd.f32 %v2333, %v2074
        %v2335 = vadd.f32 %v2334, %v2075
        %v2336 = vadd.f32 %v2335, %v2076
        %v2337 = vadd.f32 %v2336, %v2077
        %v2338 = vadd.f32 %v2337, %v2078
        %v2339 = vadd.f32 %v2338, %v2079
        %v2340 = vadd.f32 %v2339, %v2080
        %v2341 = vadd.f32 %v2340, %v2081
        %v2342 = vadd.f32 %v2341, %v2082
        %v2343 = vadd.f32 %v2342, %v2083
        %v2344 = vadd.f32 %v2343, %v2084
        %v2345 = vadd.f32 %v2344, %v2085
        %v2346 = vadd.f32 %v2345, %v2086
        %v2347 = vadd.f32 %v2346, %v2087
        %v2348 = vadd.f32 %v2347, %v2088
        %v2349 = vadd.f32 %v2348, %v2089
        %v2350 = vrot.slane %v2349, 4
        %v2351 = vadd.f32 %v2349, %v2350
        %v2352 = vrot.slane %v2351, 2
        %v2353 = vadd.f32 %v2351, %v2352
        %v2354 = vrot.slane %v2353, 1
        %v2355 = vadd.f32 %v2353, %v2354
        %v2356 = vadd.f32 %v2090, %v2091
        %v2357 = vadd.f32 %v2356, %v2092
        %v2358 = vadd.f32 %v2357, %v2093
        %v2359 = vadd.f32 %v2358, %v2094
        %v2360 = vadd.f32 %v2359, %v2095
        %v2361 = vadd.f32 %v2360, %v2096
        %v2362 = vadd.f32 %v2361, %v2097
        %v2363 = vadd.f32 %v2362, %v2098
        %v2364 = vadd.f32 %v2363, %v2099
        %v2365 = vadd.f32 %v2364, %v2100
        %v2366 = vadd.f32 %v2365, %v2101
        %v2367 = vadd.f32 %v2366, %v2102
        %v2368 = vadd.f32 %v2367, %v2103
        %v2369 = vadd.f32 %v2368, %v2104
        %v2370 = vadd.f32 %v2369, %v2105
        %v2371 = vadd.f32 %v2370, %v2106
        %v2372 = vadd.f32 %v2371, %v2107
        %v2373 = vadd.f32 %v2372, %v2108
        %v2374 = vadd.f32 %v2373, %v2109
        %v2375 = vadd.f32 %v2374, %v2110
        %v2376 = vadd.f32 %v2375, %v2111
        %v2377 = vadd.f32 %v2376, %v2112
        %v2378 = vadd.f32 %v2377, %v2113
        %v2379 = vadd.f32 %v2378, %v2114
        %v2380 = vadd.f32 %v2379, %v2115
        %v2381 = vadd.f32 %v2380, %v2116
        %v2382 = vadd.f32 %v2381, %v2117
        %v2383 = vadd.f32 %v2382, %v2118
        %v2384 = vadd.f32 %v2383, %v2119
        %v2385 = vadd.f32 %v2384, %v2120
        %v2386 = vadd.f32 %v2385, %v2121
        %v2387 = vrot.slane %v2386, 4
        %v2388 = vadd.f32 %v2386, %v2387
        %v2389 = vrot.slane %v2388, 2
        %v2390 = vadd.f32 %v2388, %v2389
        %v2391 = vrot.slane %v2390, 1
        %v2392 = vadd.f32 %v2390, %v2391
        %v2393 = vadd.f32 %v2122, %v2123
        %v2394 = vadd.f32 %v2393, %v2124
        %v2395 = vadd.f32 %v2394, %v2125
        %v2396 = vadd.f32 %v2395, %v2126
        %v2397 = vadd.f32 %v2396, %v2127
        %v2398 = vadd.f32 %v2397, %v2128
        %v2399 = vadd.f32 %v2398, %v2129
        %v2400 = vadd.f32 %v2399, %v2130
        %v2401 = vadd.f32 %v2400, %v2131
        %v2402 = vadd.f32 %v2401, %v2132
        %v2403 = vadd.f32 %v2402, %v2133
        %v2404 = vadd.f32 %v2403, %v2134
        %v2405 = vadd.f32 %v2404, %v2135
        %v2406 = vadd.f32 %v2405, %v2136
        %v2407 = vadd.f32 %v2406, %v2137
        %v2408 = vadd.f32 %v2407, %v2138
        %v2409 = vadd.f32 %v2408, %v2139
        %v2410 = vadd.f32 %v2409, %v2140
        %v2411 = vadd.f32 %v2410, %v2141
        %v2412 = vadd.f32 %v2411, %v2142
        %v2413 = vadd.f32 %v2412, %v2143
        %v2414 = vadd.f32 %v2413, %v2144
        %v2415 = vadd.f32 %v2414, %v2145
        %v2416 = vadd.f32 %v2415, %v2146
        %v2417 = vadd.f32 %v2416, %v2147
        %v2418 = vadd.f32 %v2417, %v2148
        %v2419 = vadd.f32 %v2418, %v2149
        %v2420 = vadd.f32 %v2419, %v2150
        %v2421 = vadd.f32 %v2420, %v2151
        %v2422 = vadd.f32 %v2421, %v2152
        %v2423 = vadd.f32 %v2422, %v2153
        %v2424 = vrot.slane %v2423, 4
        %v2425 = vadd.f32 %v2423, %v2424
        %v2426 = vrot.slane %v2425, 2
        %v2427 = vadd.f32 %v2425, %v2426
        %v2428 = vrot.slane %v2427, 1
        %v2429 = vadd.f32 %v2427, %v2428
        %v2430 = vadd.f32 %v2154, %v2155
        %v2431 = vadd.f32 %v2430, %v2156
        %v2432 = vadd.f32 %v2431, %v2157
        %v2433 = vadd.f32 %v2432, %v2158
        %v2434 = vadd.f32 %v2433, %v2159
        %v2435 = vadd.f32 %v2434, %v2160
        %v2436 = vadd.f32 %v2435, %v2161
        %v2437 = vadd.f32 %v2436, %v2162
        %v2438 = vadd.f32 %v2437, %v2163
        %v2439 = vadd.f32 %v2438, %v2164
        %v2440 = vadd.f32 %v2439, %v2165
        %v2441 = vadd.f32 %v2440, %v2166
        %v2442 = vadd.f32 %v2441, %v2167
        %v2443 = vadd.f32 %v2442, %v2168
        %v2444 = vadd.f32 %v2443, %v2169
        %v2445 = vadd.f32 %v2444, %v2170
        %v2446 = vadd.f32 %v2445, %v2171
        %v2447 = vadd.f32 %v2446, %v2172
        %v2448 = vadd.f32 %v2447, %v2173
        %v2449 = vadd.f32 %v2448, %v2174
        %v2450 = vadd.f32 %v2449, %v2175
        %v2451 = vadd.f32 %v2450, %v2176
        %v2452 = vadd.f32 %v2451, %v2177
        %v2453 = vadd.f32 %v2452, %v2178
        %v2454 = vadd.f32 %v2453, %v2179
        %v2455 = vadd.f32 %v2454, %v2180
        %v2456 = vadd.f32 %v2455, %v2181
        %v2457 = vadd.f32 %v2456, %v2182
        %v2458 = vadd.f32 %v2457, %v2183
        %v2459 = vadd.f32 %v2458, %v2184
        %v2460 = vadd.f32 %v2459, %v2185
        %v2461 = vrot.slane %v2460, 4
        %v2462 = vadd.f32 %v2460, %v2461
        %v2463 = vrot.slane %v2462, 2
        %v2464 = vadd.f32 %v2462, %v2463
        %v2465 = vrot.slane %v2464, 1
        %v2466 = vadd.f32 %v2464, %v2465
        %v2467 = vadd.f32 %v2186, %v2187
        %v2468 = vadd.f32 %v2467, %v2188
        %v2469 = vadd.f32 %v2468, %v2189
        %v2470 = vadd.f32 %v2469, %v2190
        %v2471 = vadd.f32 %v2470, %v2191
        %v2472 = vadd.f32 %v2471, %v2192
        %v2473 = vadd.f32 %v2472, %v2193
        %v2474 = vadd.f32 %v2473, %v2194
        %v2475 = vadd.f32 %v2474, %v2195
        %v2476 = vadd.f32 %v2475, %v2196
        %v2477 = vadd.f32 %v2476, %v2197
        %v2478 = vadd.f32 %v2477, %v2198
        %v2479 = vadd.f32 %v2478, %v2199
        %v2480 = vadd.f32 %v2479, %v2200
        %v2481 = vadd.f32 %v2480, %v2201
        %v2482 = vadd.f32 %v2481, %v2202
        %v2483 = vadd.f32 %v2482, %v2203
        %v2484 = vadd.f32 %v2483, %v2204
        %v2485 = vadd.f32 %v2484, %v2205
        %v2486 = vadd.f32 %v2485, %v2206
        %v2487 = vadd.f32 %v2486, %v2207
        %v2488 = vadd.f32 %v2487, %v2208
        %v2489 = vadd.f32 %v2488, %v2209
        %v2490 = vadd.f32 %v2489, %v2210
        %v2491 = vadd.f32 %v2490, %v2211
        %v2492 = vadd.f32 %v2491, %v2212
        %v2493 = vadd.f32 %v2492, %v2213
        %v2494 = vadd.f32 %v2493, %v2214
        %v2495 = vadd.f32 %v2494, %v2215
        %v2496 = vadd.f32 %v2495, %v2216
        %v2497 = vadd.f32 %v2496, %v2217
        %v2498 = vrot.slane %v2497, 4
        %v2499 = vadd.f32 %v2497, %v2498
        %v2500 = vrot.slane %v2499, 2
        %v2501 = vadd.f32 %v2499, %v2500
        %v2502 = vrot.slane %v2501, 1
        %v2503 = vadd.f32 %v2501, %v2502
        %v2504 = vadd.f32 %v2218, %v2219
        %v2505 = vadd.f32 %v2504, %v2220
        %v2506 = vadd.f32 %v2505, %v2221
        %v2507 = vadd.f32 %v2506, %v2222
        %v2508 = vadd.f32 %v2507, %v2223
        %v2509 = vadd.f32 %v2508, %v2224
        %v2510 = vadd.f32 %v2509, %v2225
        %v2511 = vadd.f32 %v2510, %v2226
        %v2512 = vadd.f32 %v2511, %v2227
        %v2513 = vadd.f32 %v2512, %v2228
        %v2514 = vadd.f32 %v2513, %v2229
        %v2515 = vadd.f32 %v2514, %v2230
        %v2516 = vadd.f32 %v2515, %v2231
        %v2517 = vadd.f32 %v2516, %v2232
        %v2518 = vadd.f32 %v2517, %v2233
        %v2519 = vadd.f32 %v2518, %v2234
        %v2520 = vadd.f32 %v2519, %v2235
        %v2521 = vadd.f32 %v2520, %v2236
        %v2522 = vadd.f32 %v2521, %v2237
        %v2523 = vadd.f32 %v2522, %v2238
        %v2524 = vadd.f32 %v2523, %v2239
        %v2525 = vadd.f32 %v2524, %v2240
        %v2526 = vadd.f32 %v2525, %v2241
        %v2527 = vadd.f32 %v2526, %v2242
        %v2528 = vadd.f32 %v2527, %v2243
        %v2529 = vadd.f32 %v2528, %v2244
        %v2530 = vadd.f32 %v2529, %v2245
        %v2531 = vadd.f32 %v2530, %v2246
        %v2532 = vadd.f32 %v2531, %v2247
        %v2533 = vadd.f32 %v2532, %v2248
        %v2534 = vadd.f32 %v2533, %v2249
        %v2535 = vrot.slane %v2534, 4
        %v2536 = vadd.f32 %v2534, %v2535
        %v2537 = vrot.slane %v2536, 2
        %v2538 = vadd.f32 %v2536, %v2537
        %v2539 = vrot.slane %v2538, 1
        %v2540 = vadd.f32 %v2538, %v2539
        %v2541 = vadd.f32 %v2250, %v2251
        %v2542 = vadd.f32 %v2541, %v2252
        %v2543 = vadd.f32 %v2542, %v2253
        %v2544 = vadd.f32 %v2543, %v2254
        %v2545 = vadd.f32 %v2544, %v2255
        %v2546 = vadd.f32 %v2545, %v2256
        %v2547 = vadd.f32 %v2546, %v2257
        %v2548 = vadd.f32 %v2547, %v2258
        %v2549 = vadd.f32 %v2548, %v2259
        %v2550 = vadd.f32 %v2549, %v2260
        %v2551 = vadd.f32 %v2550, %v2261
        %v2552 = vadd.f32 %v2551, %v2262
        %v2553 = vadd.f32 %v2552, %v2263
        %v2554 = vadd.f32 %v2553, %v2264
        %v2555 = vadd.f32 %v2554, %v2265
        %v2556 = vadd.f32 %v2555, %v2266
        %v2557 = vadd.f32 %v2556, %v2267
        %v2558 = vadd.f32 %v2557, %v2268
        %v2559 = vadd.f32 %v2558, %v2269
        %v2560 = vadd.f32 %v2559, %v2270
        %v2561 = vadd.f32 %v2560, %v2271
        %v2562 = vadd.f32 %v2561, %v2272
        %v2563 = vadd.f32 %v2562, %v2273
        %v2564 = vadd.f32 %v2563, %v2274
        %v2565 = vadd.f32 %v2564, %v2275
        %v2566 = vadd.f32 %v2565, %v2276
        %v2567 = vadd.f32 %v2566, %v2277
        %v2568 = vadd.f32 %v2567, %v2278
        %v2569 = vadd.f32 %v2568, %v2279
        %v2570 = vadd.f32 %v2569, %v2280
        %v2571 = vadd.f32 %v2570, %v2281
        %v2572 = vrot.slane %v2571, 4
        %v2573 = vadd.f32 %v2571, %v2572
        %v2574 = vrot.slane %v2573, 2
        %v2575 = vadd.f32 %v2573, %v2574
        %v2576 = vrot.slane %v2575, 1
        %v2577 = vadd.f32 %v2575, %v2576
        %vm2586 = vcmask 1041409
        %v2587 = vsel %vm2586, %v2355, %v2318
        %vm2588 = vcmask 1042434
        %v2589 = vsel %vm2588, %v2392, %v2587
        %vm2590 = vcmask 1043459
        %v2591 = vsel %vm2590, %v2429, %v2589
        %vm2592 = vcmask 1044484
        %v2593 = vsel %vm2592, %v2466, %v2591
        %vm2594 = vcmask 1045509
        %v2595 = vsel %vm2594, %v2503, %v2593
        %vm2596 = vcmask 1046534
        %v2597 = vsel %vm2596, %v2540, %v2595
        %vm2598 = vcmask 1047559
        %v2599 = vsel %vm2598, %v2577, %v2597
        %v2601 = vadd.f32 %v697, %v2599
        %2602 = vst [vmem:[#allocation2] sm:$0xff] %v2601
        %p2603 = scmp.eq.s32.totalorder %s30, 1
        // Predicated region
        $region57: #{tpu_custom_call.1} parent=39 // pred_check
          %p2604 = pneg %p2603
        $region58: #{tpu_custom_call.1} parent=39 // pred_check_branch
          %2606 = sbr.rel (%p2604) target = $region60
        $region59: #{tpu_custom_call.1} parent=39 // pred_region
          %v2607 = vld [vmem:[#allocation2] sm:$0xff]
          %v2608 = vld [vmem:[%s421] sm:$0xff]
          %2610 = vset.pattern.permute.xlu0 0
          %2611 = vperm.xlu0 %2610, %v2608
          %v2612 = vpop.permute.xlu0 %2611
          %v2614 = vmul.f32 %v2607, %v2612
          %v2615 = vld [vmem:[%s3] sm:$0xff]
          %v2616 = vld [vmem:[%s3 + $0x8] sm:$0xff]
          %v2617 = vld [vmem:[%s3 + $0x10] sm:$0xff]
          %v2618 = vld [vmem:[%s3 + $0x18] sm:$0xff]
          %v2619 = vld [vmem:[%s3 + $0x20] sm:$0xff]
          %v2620 = vld [vmem:[%s3 + $0x28] sm:$0xff]
          %v2621 = vld [vmem:[%s3 + $0x30] sm:$0xff]
          %v2622 = vld [vmem:[%s3 + $0x38] sm:$0xff]
          %v2623 = vld [vmem:[%s3 + $0x40] sm:$0xff]
          %v2624 = vld [vmem:[%s3 + $0x48] sm:$0xff]
          %v2625 = vld [vmem:[%s3 + $0x50] sm:$0xff]
          %v2626 = vld [vmem:[%s3 + $0x58] sm:$0xff]
          %v2627 = vld [vmem:[%s3 + $0x60] sm:$0xff]
          %v2628 = vld [vmem:[%s3 + $0x68] sm:$0xff]
          %v2629 = vld [vmem:[%s3 + $0x70] sm:$0xff]
          %v2630 = vld [vmem:[%s3 + $0x78] sm:$0xff]
          %v2631 = vld [vmem:[#allocation7] sm:$0x1]
          %v2633 = vlaneseq
          %v2634 = vshrl.u32 %v2633, 7
          %v2635 = vsub.s32 0, %v2634
          %v2636 = vrot.slane %v2631, %v2635
          %2638 = vmatprep.subr.mxu0 0.0
          %2639 = vmatpush1.msra.mxu0 %v2615
          %2640 = vmatprep.subr.mxu0 0.0
          %2641 = vmatpush1.msra.mxu0 %v2616
          %2642 = vmatprep.subr.mxu0 0.0
          %2643 = vmatpush1.msra.mxu0 %v2617
          %2644 = vmatprep.subr.mxu0 0.0
          %2645 = vmatpush1.msra.mxu0 %v2618
          %2646 = vmatprep.subr.mxu0 0.0
          %2647 = vmatpush1.msra.mxu0 %v2619
          %2648 = vmatprep.subr.mxu0 0.0
          %2649 = vmatpush1.msra.mxu0 %v2620
          %2650 = vmatprep.subr.mxu0 0.0
          %2651 = vmatpush1.msra.mxu0 %v2621
          %2652 = vmatprep.subr.mxu0 0.0
          %2653 = vmatpush1.msra.mxu0 %v2622
          %2654 = vmatprep.subr.mxu0 0.0
          %2655 = vmatpush1.msra.mxu0 %v2623
          %2656 = vmatprep.subr.mxu0 0.0
          %2657 = vmatpush1.msra.mxu0 %v2624
          %2658 = vmatprep.subr.mxu0 0.0
          %2659 = vmatpush1.msra.mxu0 %v2625
          %2660 = vmatprep.subr.mxu0 0.0
          %2661 = vmatpush1.msra.mxu0 %v2626
          %2662 = vmatprep.subr.mxu0 0.0
          %2663 = vmatpush1.msra.mxu0 %v2627
          %2664 = vmatprep.subr.mxu0 0.0
          %2665 = vmatpush1.msra.mxu0 %v2628
          %2666 = vmatprep.subr.mxu0 0.0
          %2667 = vmatpush1.msra.mxu0 %v2629
          %2668 = vmatprep.subr.mxu0 0.0
          %2669 = vmatpush1.msra.mxu0 %v2630
          %2670 = vmatprep.subr.mxu0 0.0
          %2671 = vmatpush1.msra.mxu0 0.0
          %2672 = vmatprep.subr.mxu0 0.0
          %2673 = vmatpush1.msra.mxu0 0.0
          %2674 = vmatprep.subr.mxu0 0.0
          %2675 = vmatpush1.msra.mxu0 0.0
          %2676 = vmatprep.subr.mxu0 0.0
          %2677 = vmatpush1.msra.mxu0 0.0
          %2678 = vmatprep.subr.mxu0 0.0
          %2679 = vmatpush1.msra.mxu0 0.0
          %2680 = vmatprep.subr.mxu0 0.0
          %2681 = vmatpush1.msra.mxu0 0.0
          %2682 = vmatprep.subr.mxu0 0.0
          %2683 = vmatpush1.msra.mxu0 0.0
          %2684 = vmatprep.subr.mxu0 0.0
          %2685 = vmatpush1.msra.mxu0 0.0
          %2686 = vmatprep.subr.mxu0 0.0
          %2687 = vmatpush1.msra.mxu0 0.0
          %2688 = vmatprep.subr.mxu0 0.0
          %2689 = vmatpush1.msra.mxu0 0.0
          %2690 = vmatprep.subr.mxu0 0.0
          %2691 = vmatpush1.msra.mxu0 0.0
          %2692 = vmatprep.subr.mxu0 0.0
          %2693 = vmatpush1.msra.mxu0 0.0
          %2694 = vmatprep.subr.mxu0 0.0
          %2695 = vmatpush1.msra.mxu0 0.0
          %2696 = vmatprep.subr.mxu0 0.0
          %2697 = vmatpush1.msra.mxu0 0.0
          %2698 = vmatprep.subr.mxu0 0.0
          %2699 = vmatpush1.msra.mxu0 0.0
          %2700 = vmatprep.subr.mxu0 0.0
          %2701 = vmatpush1.msra.mxu0 0.0
          %2702 = vmatprep.mubr.f32.mxu0 0.0
          %2703 = vmatmul.mubr.f32.gmra.mrb[0].mxu0 %v2614
          %v2704 = vpop.f32.mrb[0].mxu0
          %v2705 = vadd.f32 %v2636, %v2704
          %v2706 = vpop.f32.mrb[0].mxu0
          %2707 = vdwg.mxu0
          %vm2708 = vcmask 64512
          %2709 = vst.msk [vmem:[%s425] sm:$0xff] %vm2708, %v2705
          %v2710 = vsel %vm2708, %v2705, -inf
          %2711 = vmax.xlane.f32.xlu0 %v2710
          %v2712 = vpop.xlane.xlu0 %2711
          %v2713 = vsub.f32 %v2705, %v2712
          %v2714 = vmul.f32 %v2713, 1.442695
          %v2715 = vpow.pop %v2714
          %v2716 = vsel %vm2708, %v2715, 0.0
          %2717 = vadd.xlane.f32.xlu0 %v2716
          %v2718 = vpop.xlane.xlu0 %2717
          %v2719 = vrcp.pop %v2718
          %v2720 = vmul.f32 %v2715, %v2719
          %2721 = vst.msk [vmem:[%s429] sm:$0xff] %vm2708, %v2720
          %v2722 = vlaneseq
          %v2723 = vand.u32 %v2722, 127
          %vm2724 = vcmp.eq.f32.partialorder %v2705, %v2712
          %v2725 = vsel %vm2724, %v2723, 8
          %v2726 = vsel %vm2708, %v2725, 2147483647
          %v2727 = vand.u32 %v2726, 65535
          %v2728 = vshra.s32 %v2726, 16
          %v2729 = vcvt.s32.f32 %v2727
          %v2730 = vcvt.s32.f32 %v2728
          %2731 = vmin.xlane.f32.xlu0 %v2730
          %v2732 = vpop.xlane.xlu0 %2731
          %vm2733 = vcmp.eq.f32.partialorder %v2730, %v2732
          %v2734 = vsel %vm2733, %v2729, inf
          %2735 = vmin.xlane.f32.xlu0 %v2734
          %v2736 = vpop.xlane.xlu0 %2735
          %v2737 = vcvt.f32.s32 %v2736
          %v2738 = vcvt.f32.s32 %v2732
          %v2739 = vshll.u32 %v2738, 16
          %v2740 = vadd.s32 %v2739, %v2737
          %vm2741 = vcmask 7168
          %2742 = vst.msk [vmem:[%s433] sm:$0xff] %vm2741, %v2740
        $region60: #{tpu_custom_call.1} parent=39 // pred_fallthru
          _
        %p2743 = scmp.lt.s32.totalorder %s29, 1
        %s2744 = scalar_select %p2743, %s29, 1
        %s2745 = smul.addr %s2744, 8
        %s2746 = scalar_lea.vmem %s5, %s2745
        %p2747 = scmp.lt.s32.totalorder %s29, 1
        %s2748 = scalar_select %p2747, %s29, 1
        %s2749 = smul.addr %s2748, 8
        %s2750 = scalar_lea.vmem %s6, %s2749
        %p2751 = scmp.lt.s32.totalorder %s29, 1
        %s2752 = scalar_select %p2751, %s29, 1
        %s2753 = smul.addr %s2752, 8
        %s2754 = scalar_lea.vmem %s7, %s2753
        // Predicated region
        $region61: #{tpu_custom_call.1} parent=39 // pred_check
          %p2755 = pneg %p179
        $region62: #{tpu_custom_call.1} parent=39 // pred_check_branch
          %2757 = sbr.rel (%p2755) target = $region64
        $region63: #{tpu_custom_call.1} parent=39 // pred_region
          _
        $region64: #{tpu_custom_call.1} parent=39 // pred_fallthru
          _
        // Predicated region
        $region65: #{tpu_custom_call.1} parent=39 // pred_check
          %p2758 = pneg %p205
        $region66: #{tpu_custom_call.1} parent=39 // pred_check_branch
          %2760 = sbr.rel (%p2758) target = $region68
        $region67: #{tpu_custom_call.1} parent=39 // pred_region
          _
        $region68: #{tpu_custom_call.1} parent=39 // pred_fallthru
          _
        // Predicated region
        $region69: #{tpu_custom_call.1} parent=39 // pred_check
          %p2761 = pneg %p231
        $region70: #{tpu_custom_call.1} parent=39 // pred_check_branch
          %2763 = sbr.rel (%p2761) target = $region72
        $region71: #{tpu_custom_call.1} parent=39 // pred_region
          _
        $region72: #{tpu_custom_call.1} parent=39 // pred_fallthru
          _
      $region40: #{tpu_custom_call.1} parent=5 // pred_fallthru
        _
      %p2764 = scmp.le.s32.totalorder 2, %s20
      // Predicated region
      $region73: #{tpu_custom_call.1} parent=5 // pred_check
        %p2765 = pneg %p2764
      $region74: #{tpu_custom_call.1} parent=5 // pred_check_branch
        %2767 = sbr.rel (%p2765) target = $region76
      $region75: #{tpu_custom_call.1} parent=5 // pred_region
        %s2768 = ssub.s32 %s20, 2
        // Predicated region
        $region77: #{tpu_custom_call.1} parent=75 // pred_check
          %p2769 = pneg %p185
        $region78: #{tpu_custom_call.1} parent=75 // pred_check_branch
          %2771 = sbr.rel (%p2769) target = $region80
        $region79: #{tpu_custom_call.1} parent=75 // pred_region
          %p2772 = scmp.lt.s32.totalorder %s31, 1
          %s2773 = scalar_select %p2772, %s31, 1
          %s2774 = smul.addr %s2773, 8
          %s2775 = scalar_lea.vmem %s5, %s2774
        $region80: #{tpu_custom_call.1} parent=75 // pred_fallthru
          _
        // Predicated region
        $region81: #{tpu_custom_call.1} parent=75 // pred_check
          %p2776 = pneg %p211
        $region82: #{tpu_custom_call.1} parent=75 // pred_check_branch
          %2778 = sbr.rel (%p2776) target = $region84
        $region83: #{tpu_custom_call.1} parent=75 // pred_region
          %p2779 = scmp.lt.s32.totalorder %s31, 1
          %s2780 = scalar_select %p2779, %s31, 1
          %s2781 = smul.addr %s2780, 8
          %s2782 = scalar_lea.vmem %s6, %s2781
        $region84: #{tpu_custom_call.1} parent=75 // pred_fallthru
          _
        // Predicated region
        $region85: #{tpu_custom_call.1} parent=75 // pred_check
          %p2783 = pneg %p237
        $region86: #{tpu_custom_call.1} parent=75 // pred_check_branch
          %2785 = sbr.rel (%p2783) target = $region88
        $region87: #{tpu_custom_call.1} parent=75 // pred_region
          %p2786 = scmp.lt.s32.totalorder %s31, 1
          %s2787 = scalar_select %p2786, %s31, 1
          %s2788 = smul.addr %s2787, 8
          %s2789 = scalar_lea.vmem %s7, %s2788
        $region88: #{tpu_custom_call.1} parent=75 // pred_fallthru
          _
      $region76: #{tpu_custom_call.1} parent=5 // pred_fallthru
        _
    $region6: #{tpu_custom_call.1} parent=1 // loop_footer
      %s24 = sadd.s32 1, %s20
    $region7: #{tpu_custom_call.1} parent=1 // loop_footer_branch
      %19 = sbr.rel target = $region3
    $region8: #{tpu_custom_call.1} parent=1 // loop_exit
      _
    %2790 = vsyncpa [#allocation4], 1
    %s2791 = scalar_lea.sflag [#allocation4], 1
    %2792 = vsyncpa %s2791, 1
    %2793 = vsyncpa [#allocation6], 1
    %s2794 = scalar_lea.sflag [#allocation6], 1
    %2795 = vsyncpa %s2794, 1

</llo_original>
